<compile_context>
chip_gen: v6e
topology: v6e:2x2x1
jax: 0.10.0
libtpu: 0.0.40
codegen_flags: <defaults>
</compile_context>

<pallas_src>
import jax
import jax.numpy as jnp
from jax.experimental import pallas as pl
from jax.experimental.pallas import tpu as pltpu

# ----------------------------- configuration -------------------------------
ATOM_DIMS = [16, 8, 4]      # synthetic get_atom_feature_dims()
BOND_DIMS = [4, 3, 2]       # synthetic get_bond_feature_dims()
SELF_LOOP_TYPEID = 3        # synthetic get_self_loops_typeid() (< BOND_DIMS[0])
EMB = 32                    # emb_dim
NUM_LAYER = 2
N_NODES = 16
N_EDGES = 24
N_GRAPHS = 2
N_MASK = 4
EPS = 1e-5

E_TOT = N_EDGES + N_NODES   # edge count incl. self loops
ATOT = sum(ATOM_DIMS)       # 28
BTOT = sum(BOND_DIMS)       # 9
OUT_W = 128                 # lane-dense packed output width


def _prefix(dims):
    out, c = [], 0
    for d in dims:
        out.append(c)
        c += d
    return out


ATOM_OFF = _prefix(ATOM_DIMS)       # [0, 16, 24]
BOND_OFF = _prefix(BOND_DIMS)       # [0, 4, 7]


def _layout(sizes, align):
    off, cur = {}, 0
    for name, sz in sizes:
        off[name] = cur
        cur = ((cur + sz + align - 1) // align) * align
    return off, cur


# bf16 param slab with EMB-wide rows (16-row-aligned regions keep slices on
# sublane-tile boundaries of the packed bf16 layout).
P32_OFF, P32_ROWS = _layout(
    [("atom", ATOT), ("edge0", BTOT), ("edge1", BTOT),
     ("w2_0", 2 * EMB), ("w2_1", 2 * EMB), ("bn0", 3), ("bn1", 3),
     ("wd", EMB), ("small", 3), ("wout", EMB), ("bout", 1)], align=16)
# bf16 param slab with 2*EMB-wide rows.
P64_OFF, P64_ROWS = _layout(
    [("w1_0", EMB), ("b1_0", 1), ("w1_1", EMB), ("b1_1", 1)], align=16)

# int32 index block (one operand for all graph-structure indices).
IDX_SRC, IDX_DST, IDX_BATCH, IDX_EATTR = 0, 1, 2, 3   # row-form rows
IDX_COLBLK = 8                                        # column-form block start
IDX_XCOL, IDX_MASKCOL = 0, 3                          # columns inside block
IDX_ROWS = IDX_COLBLK + N_NODES
IDX_COLS = 128
assert E_TOT <= IDX_COLS

_VMEM_SPEC = pl.BlockSpec(memory_space=pltpu.MemorySpace.VMEM)


# ------------------------------ fused kernel --------------------------------
def fused_gnn_kernel(idx_ref, p32_ref, p64_ref, out_ref):
    f32, bf16 = jnp.float32, jnp.bfloat16
    n, e, g, m = N_NODES, E_TOT, N_GRAPHS, N_MASK

    def p32(name, rows):
        o = P32_OFF[name]
        return p32_ref[o:o + rows, :]

    def p64(name, rows):
        o = P64_OFF[name]
        return p64_ref[o:o + rows, :]

    # --- one-hot builders (bf16 exact for 0/1) -----------------------------
    def oh_from_rows(rows, height):
        # rows: [k, C] row-layout indices -> [height, C] (sublane-iota compare)
        io = jax.lax.broadcasted_iota(jnp.int32, (height, rows.shape[1]), 0)
        acc = (io == rows[0:1, :]).astype(bf16)
        for i in range(1, rows.shape[0]):
            acc = acc + (io == rows[i:i + 1, :]).astype(bf16)
        return acc

    def oh_from_cols(cols, width):
        # cols: [R, k] column-layout indices -> [R, width] (only tiny N/M rows)
        io = jax.lax.broadcasted_iota(jnp.int32, (cols.shape[0], width), 1)
        acc = (io == cols[:, 0:1]).astype(bf16)
        for i in range(1, cols.shape[1]):
            acc = acc + (io == cols[:, i:i + 1]).astype(bf16)
        return acc

    def dot_t(a, b):  # contract last dims of both operands (A @ B^T on MXU)
        return jax.lax.dot_general(a, b, (((1,), (1,)), ((), ())),
                                   preferred_element_type=f32)

    # --- structural operands, built once ------------------------------------
    src_oh = oh_from_rows(idx_ref[IDX_SRC:IDX_SRC + 1, 0:e], n)          # [N,E]
    dst_oh = oh_from_rows(idx_ref[IDX_DST:IDX_DST + 1, 0:e], n)          # [N,E]
    edge_ohT = oh_from_rows(idx_ref[IDX_EATTR:IDX_EATTR + 3, 0:e], BTOT)  # [B,E]
    pool_oh = oh_from_rows(idx_ref[IDX_BATCH:IDX_BATCH + 1, 0:n], g)     # [G,N]
    atom_oh = oh_from_cols(
        idx_ref[IDX_COLBLK:IDX_COLBLK + n, IDX_XCOL:IDX_XCOL + 3], ATOT)  # [N,A]
    mask_oh = oh_from_cols(
        idx_ref[IDX_COLBLK:IDX_COLBLK + m,
                IDX_MASKCOL:IDX_MASKCOL + 1], n)                          # [M,N]

    # Adjacency / per-node edge-type counts shared by BOTH GIN layers:
    #   aggr_l = Adj @ h_l + Cedge @ edge_table_l        (small integer counts
    #   are exact in bf16).
    adj = dot_t(dst_oh, src_oh).astype(bf16)        # [N, N]
    cedge = dot_t(dst_oh, edge_ohT).astype(bf16)    # [N, BTOT]

    # --- fused atom MulOnehotEncoder: one matmul ----------------------------
    h = jnp.dot(atom_oh, p32("atom", ATOT), preferred_element_type=f32)  # [N,D]

    # --- GIN layers ----------------------------------------------------------
    def gin_layer(h, edge_tab, w1, b1, w2, bn, apply_relu):
        eagg = jnp.dot(cedge, edge_tab, preferred_element_type=f32)
        aggr = jnp.dot(adj, h.astype(bf16), preferred_element_type=f32) + eagg
        h1 = jnp.maximum(
            jnp.dot(aggr.astype(bf16), w1, preferred_element_type=f32) + b1,
            0.0)
        h2 = jnp.dot(h1.astype(bf16), w2,
                     preferred_element_type=f32) + bn[0:1, :]
        # BatchNorm1d, training-mode batch statistics (biased variance).
        # TODO(synk): at large N compute mean/var via a ones-row matmul (MXU)
        # instead of a cross-sublane reduction; negligible at N=16.
        mean = jnp.mean(h2, axis=0, keepdims=True)
        var = jnp.mean((h2 - mean) ** 2, axis=0, keepdims=True)
        hn = (h2 - mean) * jax.lax.rsqrt(var + EPS) * bn[1:2, :] + bn[2:3, :]
        return jnp.maximum(hn, 0.0) if apply_relu else hn

    for layer in range(NUM_LAYER):
        t = str(layer)
        h = gin_layer(h,
                      p32("edge" + t, BTOT),
                      p64("w1_" + t, EMB), p64("b1_" + t, 1),
                      p32("w2_" + t, 2 * EMB), p32("bn" + t, 3),
                      apply_relu=(layer != NUM_LAYER - 1))

    node = h                                      # JK == 'last', [N, EMB] f32
    node_bf = node.astype(bf16)

    # --- global mean pool ----------------------------------------------------
    gsum = jnp.dot(pool_oh, node_bf, preferred_element_type=f32)         # [G,D]
    cnt = jnp.sum(pool_oh.astype(f32), axis=1, keepdims=True)
    graph = gsum / jnp.maximum(cnt, 1.0)

    # --- atom head: masked gather + dense + relu + LayerNorm + tied proj -----
    xm = jnp.dot(mask_oh, node_bf, preferred_element_type=f32)           # [M,D]
    small = p32("small", 3)                 # rows: dense bias, ln gamma, ln beta
    xh = jnp.maximum(
        jnp.dot(xm.astype(bf16), p32("wd", EMB),
                preferred_element_type=f32) + small[0:1, :], 0.0)
    mu = jnp.mean(xh, axis=-1, keepdims=True)
    var = jnp.mean((xh - mu) ** 2, axis=-1, keepdims=True)
    xh = (xh - mu) * jax.lax.rsqrt(var + EPS) * small[1:2, :] + small[2:3, :]
    # wout / bout are zero-padded from width 16 to EMB, so the padded output
    # columns of `pred` are exactly zero.
    pred = (jnp.dot(xh.astype(bf16), p32("wout", EMB),
                    preferred_element_type=f32) + p32("bout", 1))        # [M,D]

    # --- single lane-dense packed store: one unmasked [N, 128] write ---------
    graph_blk = jnp.concatenate([graph, jnp.zeros((n - g, EMB), f32)], axis=0)
    pred_blk = jnp.concatenate([pred, jnp.zeros((n - m, EMB), f32)], axis=0)
    pad = jnp.zeros((n, OUT_W - 3 * EMB), f32)
    out_ref[...] = jnp.concatenate([node, graph_blk, pred_blk, pad], axis=1)


# ------------------------------- packing ------------------------------------
def pack_indices(x, edge_index, edge_attr, batch, masked_pos):
    """All graph-structure indices packed into one padded int32 block."""
    n = x.shape[0]
    sl = jnp.arange(n, dtype=jnp.int32)
    ei = jnp.concatenate(
        [edge_index.astype(jnp.int32), jnp.stack([sl, sl])], axis=1)    # [2,E]
    sla = jnp.zeros((n, len(BOND_DIMS)),
                    jnp.int32).at[:, 0].set(SELF_LOOP_TYPEID)
    ea = jnp.concatenate([edge_attr.astype(jnp.int32), sla], axis=0)    # [E,3]
    e = ei.shape[1]

    ea_off = (ea + jnp.array(BOND_OFF, jnp.int32)[None, :]).T           # [3,E]
    x_off = x.astype(jnp.int32) + jnp.array(ATOM_OFF, jnp.int32)[None, :]

    idx = jnp.full((IDX_ROWS, IDX_COLS), -1, jnp.int32)
    idx = idx.at[IDX_SRC, :e].set(ei[0])
    idx = idx.at[IDX_DST, :e].set(ei[1])
    idx = idx.at[IDX_BATCH, :n].set(batch.astype(jnp.int32))
    idx = idx.at[IDX_EATTR:IDX_EATTR + 3, :e].set(ea_off)
    idx = idx.at[IDX_COLBLK:IDX_COLBLK + n,
                 IDX_XCOL:IDX_XCOL + 3].set(x_off)
    idx = idx.at[IDX_COLBLK:IDX_COLBLK + masked_pos.shape[0],
                 IDX_MASKCOL].set(masked_pos.astype(jnp.int32))
    return idx


def pack_params(params):
    """All weights packed into two bf16 slabs (EMB-wide and 2*EMB-wide)."""
    def put(slab, name, arr, off_map):
        o = off_map[name]
        r, c = arr.shape
        return slab.at[o:o + r, :c].set(arr.astype(jnp.bfloat16))

    p32 = jnp.zeros((P32_ROWS, EMB), jnp.bfloat16)
    p64 = jnp.zeros((P64_ROWS, 2 * EMB), jnp.bfloat16)

    p32 = put(p32, "atom", jnp.concatenate(params["atom_emb"], axis=0), P32_OFF)
    for i, lp in enumerate(params["layers"]):
        t = str(i)
        p32 = put(p32, "edge" + t, jnp.concatenate(lp["edge_emb"], axis=0),
                  P32_OFF)
        p32 = put(p32, "w2_" + t, lp["w2"], P32_OFF)
        p32 = put(p32, "bn" + t, lp["bn_pack"], P32_OFF)
        p64 = put(p64, "w1_" + t, lp["w1"], P64_OFF)
        p64 = put(p64, "b1_" + t, lp["b1"], P64_OFF)
    hp = params["atom_head"]
    p32 = put(p32, "wd", hp["wd"], P32_OFF)
    p32 = put(p32, "small", hp["small"], P32_OFF)
    p32 = put(p32, "wout", hp["wout_T"], P32_OFF)   # [EMB,16] -> zero-pad cols
    p32 = put(p32, "bout", hp["bout"], P32_OFF)
    return p32, p64


# ------------------------------- wrapper -------------------------------------
def gnn_forward(params, x, edge_index, edge_attr, batch, masked_pos):
    idx = pack_indices(x, edge_index, edge_attr, batch, masked_pos)
    p32, p64 = pack_params(params)

    # TODO(synk): for batched inference over many graph-batches add a leading
    # grid axis with dimension_semantics=("parallel",) so both v7x TensorCores
    # are used; a single ungridded call runs on one core.
    # TODO(synk): at real graph sizes replace the dense [N,E] one-hot
    # adjacency build with PrefetchScalarGridSpec scalar-prefetched edge
    # indices + per-node-tile accumulation (and size tiles for v7x's 64 MiB
    # VMEM).
    out = pl.pallas_call(
        fused_gnn_kernel,
        out_shape=jax.ShapeDtypeStruct((N_NODES, OUT_W), jnp.float32),
        in_specs=[_VMEM_SPEC] * 3,
        out_specs=_VMEM_SPEC,
    )(idx, p32, p64)

    node = out[:, 0:EMB]
    graph = out[0:N_GRAPHS, EMB:2 * EMB]
    pred = out[0:masked_pos.shape[0], 2 * EMB:2 * EMB + ATOM_DIMS[0]]
    return graph, node, pred


# --------------------------- pure-JAX reference ------------------------------
def reference_forward(params, x, edge_index, edge_attr, batch, masked_pos):
    n = x.shape[0]
    sl = jnp.arange(n, dtype=edge_index.dtype)
    ei = jnp.concatenate([edge_index, jnp.stack([sl, sl])], axis=1)
    sla = jnp.zeros((n, len(BOND_DIMS)), edge_attr.dtype)
    sla = sla.at[:, 0].set(SELF_LOOP_TYPEID)
    ea = jnp.concatenate([edge_attr, sla], axis=0)

    def emb(tables, idx):
        out = tables[0][idx[:, 0]]
        for i in range(1, idx.shape[1]):
            out = out + tables[i][idx[:, i]]
        return out

    h = emb(params["atom_emb"], x)
    for li, lp in enumerate(params["layers"]):
        eemb = emb(lp["edge_emb"], ea)
        msg = h[ei[0]] + eemb
        aggr = jax.ops.segment_sum(msg, ei[1], num_segments=n)
        h1 = jnp.maximum(aggr @ lp["w1"] + lp["b1"], 0.0)
        h2 = h1 @ lp["w2"] + lp["bn_pack"][0:1]
        mean = h2.mean(0, keepdims=True)
        var = ((h2 - mean) ** 2).mean(0, keepdims=True)
        hn = (h2 - mean) / jnp.sqrt(var + EPS)
        hn = hn * lp["bn_pack"][1:2] + lp["bn_pack"][2:3]
        h = jnp.maximum(hn, 0.0) if li != NUM_LAYER - 1 else hn
    node = h
    gsum = jax.ops.segment_sum(node, batch, num_segments=N_GRAPHS)
    cnt = jax.ops.segment_sum(jnp.ones((n, 1), jnp.float32), batch,
                              num_segments=N_GRAPHS)
    graph = gsum / jnp.maximum(cnt, 1.0)
    hp = params["atom_head"]
    xm = node[masked_pos]
    xh = jnp.maximum(xm @ hp["wd"] + hp["small"][0:1], 0.0)
    mu = xh.mean(-1, keepdims=True)
    va = ((xh - mu) ** 2).mean(-1, keepdims=True)
    xh = (xh - mu) / jnp.sqrt(va + EPS) * hp["small"][1:2] + hp["small"][2:3]
    pred = xh @ hp["wout_T"] + hp["bout"]
    return graph, node, pred


# ------------------------------- parameters ----------------------------------
def init_params(key):
    def dense(k, shape, scale):
        return jax.random.normal(k, shape, dtype=jnp.float32) * scale

    keys = jax.random.split(key, 64)
    ki = iter(range(64))

    atom_emb = [dense(keys[next(ki)], (d, EMB), (6.0 / (d + EMB)) ** 0.5)
                for d in ATOM_DIMS]

    layers = []
    for _ in range(NUM_LAYER):
        edge_emb = [dense(keys[next(ki)], (d, EMB), (6.0 / (d + EMB)) ** 0.5)
                    for d in BOND_DIMS]
        bn_pack = jnp.concatenate(
            [jnp.zeros((1, EMB), jnp.float32),    # b2
             jnp.ones((1, EMB), jnp.float32),     # bn gamma
             jnp.zeros((1, EMB), jnp.float32)],   # bn beta
            axis=0)
        layers.append(dict(
            edge_emb=edge_emb,
            w1=dense(keys[next(ki)], (EMB, 2 * EMB), EMB ** -0.5),
            b1=jnp.zeros((1, 2 * EMB), jnp.float32),
            w2=dense(keys[next(ki)], (2 * EMB, EMB), (2 * EMB) ** -0.5),
            bn_pack=bn_pack,
        ))

    atom_head_small = jnp.concatenate(
        [jnp.zeros((1, EMB), jnp.float32),        # dense bias
         jnp.ones((1, EMB), jnp.float32),         # LayerNorm gamma
         jnp.zeros((1, EMB), jnp.float32)],       # LayerNorm beta
        axis=0)
    atom_head_p = dict(
        wd=dense(keys[next(ki)], (EMB, EMB), EMB ** -0.5),
        small=atom_head_small,
        wout_T=atom_emb[0].T,                     # tied weight, F.linear(x, W)
        bout=jnp.zeros((1, ATOM_DIMS[0]), jnp.float32),
    )

    return dict(atom_emb=atom_emb, layers=layers, atom_head=atom_head_p)


# ---------------------------------- main --------------------------------------
if __name__ == "__main__":
    key = jax.random.PRNGKey(0)
    k_par, k_x, k_ei, k_ea = jax.random.split(key, 4)

    params = init_params(k_par)

    # synthetic graph batch (2 graphs, 8 nodes each)
    kx = jax.random.split(k_x, len(ATOM_DIMS))
    x = jnp.stack([jax.random.randint(kx[i], (N_NODES,), 0, ATOM_DIMS[i])
                   for i in range(len(ATOM_DIMS))], axis=1).astype(jnp.int32)
    edge_index = jax.random.randint(k_ei, (2, N_EDGES), 0, N_NODES,
                                    dtype=jnp.int32)
    ke = jax.random.split(k_ea, len(BOND_DIMS))
    edge_attr = jnp.stack([jax.random.randint(ke[i], (N_EDGES,), 0,
                                              BOND_DIMS[i])
                           for i in range(len(BOND_DIMS))],
                          axis=1).astype(jnp.int32)
    batch = jnp.concatenate([jnp.zeros((8,), jnp.int32),
                             jnp.ones((8,), jnp.int32)])
    masked_pos = jnp.array([1, 5, 9, 14], dtype=jnp.int32)
    assert masked_pos.shape[0] == N_MASK

    graph_rep, node_rep, pred_atoms = gnn_forward(
        params, x, edge_index, edge_attr, batch, masked_pos)
    jax.block_until_ready((graph_rep, node_rep, pred_atoms))

    assert graph_rep.shape == (N_GRAPHS, EMB)
    assert node_rep.shape == (N_NODES, EMB)
    assert pred_atoms.shape == (N_MASK, ATOM_DIMS[0])

    # sanity check vs. pure-f32 reference; the kernel runs bf16 operands with
    # f32 accumulation, so allow a mixed-precision tolerance.
    g_ref, n_ref, p_ref = reference_forward(
        params, x, edge_index, edge_attr, batch, masked_pos)
    for got, ref in ((graph_rep, g_ref), (node_rep, n_ref),
                     (pred_atoms, p_ref)):
        assert not bool(jnp.any(jnp.isnan(got)))
        assert float(jnp.max(jnp.abs(got - ref))) < 2e-1

    print("KERNEL_OK")
</pallas_src>

<mosaic_0001>
module attributes {stable_mosaic.version = 11 : i64} {
  func.func @fused_gnn_kernel(%arg0: memref<24x128xi32, #tpu.memory_space<vmem>>, %arg1: memref<320x32xbf16, #tpu.memory_space<vmem>>, %arg2: memref<96x64xbf16, #tpu.memory_space<vmem>>, %arg3: memref<16x128xf32, #tpu.memory_space<vmem>>) attributes {dimension_semantics = [], scalar_prefetch = 0 : i64, scratch_operands = 0 : i64, tpu.core_type = #tpu.core_type<tc>} {
    %c0 = arith.constant 0 : index
    %c0_0 = arith.constant 0 : index
    %0 = vector.load %arg0[%c0, %c0_0] : memref<24x128xi32, #tpu.memory_space<vmem>>, vector<1x40xi32>
    %1 = tpu.iota {dimensions = array<i32: 0>} : vector<16x40xi32>
    %2 = vector.broadcast %0 : vector<1x40xi32> to vector<16x40xi32>
    %3 = arith.cmpi eq, %1, %2 : vector<16x40xi32>
    %4 = arith.extui %3 : vector<16x40xi1> to vector<16x40xi32>
    %5 = arith.sitofp %4 : vector<16x40xi32> to vector<16x40xf32>
    %6 = arith.truncf %5 : vector<16x40xf32> to vector<16x40xbf16>
    %c1 = arith.constant 1 : index
    %c0_1 = arith.constant 0 : index
    %7 = vector.load %arg0[%c1, %c0_1] : memref<24x128xi32, #tpu.memory_space<vmem>>, vector<1x40xi32>
    %8 = tpu.iota {dimensions = array<i32: 0>} : vector<16x40xi32>
    %9 = vector.broadcast %7 : vector<1x40xi32> to vector<16x40xi32>
    %10 = arith.cmpi eq, %8, %9 : vector<16x40xi32>
    %11 = arith.extui %10 : vector<16x40xi1> to vector<16x40xi32>
    %12 = arith.sitofp %11 : vector<16x40xi32> to vector<16x40xf32>
    %13 = arith.truncf %12 : vector<16x40xf32> to vector<16x40xbf16>
    %c3 = arith.constant 3 : index
    %c0_2 = arith.constant 0 : index
    %14 = vector.load %arg0[%c3, %c0_2] : memref<24x128xi32, #tpu.memory_space<vmem>>, vector<3x40xi32>
    %15 = tpu.iota {dimensions = array<i32: 0>} : vector<9x40xi32>
    %16 = vector.extract_strided_slice %14 {offsets = [0, 0], sizes = [1, 40], strides = [1, 1]} : vector<3x40xi32> to vector<1x40xi32>
    %17 = vector.broadcast %16 : vector<1x40xi32> to vector<9x40xi32>
    %18 = arith.cmpi eq, %15, %17 : vector<9x40xi32>
    %19 = arith.extui %18 : vector<9x40xi1> to vector<9x40xi32>
    %20 = arith.sitofp %19 : vector<9x40xi32> to vector<9x40xf32>
    %21 = arith.truncf %20 : vector<9x40xf32> to vector<9x40xbf16>
    %22 = vector.extract_strided_slice %14 {offsets = [1, 0], sizes = [1, 40], strides = [1, 1]} : vector<3x40xi32> to vector<1x40xi32>
    %23 = vector.broadcast %22 : vector<1x40xi32> to vector<9x40xi32>
    %24 = arith.cmpi eq, %15, %23 : vector<9x40xi32>
    %25 = arith.extui %24 : vector<9x40xi1> to vector<9x40xi32>
    %26 = arith.sitofp %25 : vector<9x40xi32> to vector<9x40xf32>
    %27 = arith.truncf %26 : vector<9x40xf32> to vector<9x40xbf16>
    %28 = arith.addf %21, %27 : vector<9x40xbf16>
    %29 = vector.extract_strided_slice %14 {offsets = [2, 0], sizes = [1, 40], strides = [1, 1]} : vector<3x40xi32> to vector<1x40xi32>
    %30 = vector.broadcast %29 : vector<1x40xi32> to vector<9x40xi32>
    %31 = arith.cmpi eq, %15, %30 : vector<9x40xi32>
    %32 = arith.extui %31 : vector<9x40xi1> to vector<9x40xi32>
    %33 = arith.sitofp %32 : vector<9x40xi32> to vector<9x40xf32>
    %34 = arith.truncf %33 : vector<9x40xf32> to vector<9x40xbf16>
    %35 = arith.addf %28, %34 : vector<9x40xbf16>
    %c2 = arith.constant 2 : index
    %c0_3 = arith.constant 0 : index
    %36 = vector.load %arg0[%c2, %c0_3] : memref<24x128xi32, #tpu.memory_space<vmem>>, vector<1x16xi32>
    %37 = tpu.iota {dimensions = array<i32: 0>} : vector<2x16xi32>
    %38 = vector.broadcast %36 : vector<1x16xi32> to vector<2x16xi32>
    %39 = arith.cmpi eq, %37, %38 : vector<2x16xi32>
    %40 = arith.extui %39 : vector<2x16xi1> to vector<2x16xi32>
    %41 = arith.sitofp %40 : vector<2x16xi32> to vector<2x16xf32>
    %42 = arith.truncf %41 : vector<2x16xf32> to vector<2x16xbf16>
    %c8 = arith.constant 8 : index
    %c0_4 = arith.constant 0 : index
    %43 = vector.load %arg0[%c8, %c0_4] : memref<24x128xi32, #tpu.memory_space<vmem>>, vector<16x3xi32>
    %44 = tpu.iota {dimensions = array<i32: 1>} : vector<16x28xi32>
    %45 = vector.extract_strided_slice %43 {offsets = [0, 0], sizes = [16, 1], strides = [1, 1]} : vector<16x3xi32> to vector<16x1xi32>
    %46 = vector.broadcast %45 : vector<16x1xi32> to vector<16x28xi32>
    %47 = arith.cmpi eq, %44, %46 : vector<16x28xi32>
    %48 = arith.extui %47 : vector<16x28xi1> to vector<16x28xi32>
    %49 = arith.sitofp %48 : vector<16x28xi32> to vector<16x28xf32>
    %50 = arith.truncf %49 : vector<16x28xf32> to vector<16x28xbf16>
    %51 = vector.extract_strided_slice %43 {offsets = [0, 1], sizes = [16, 1], strides = [1, 1]} : vector<16x3xi32> to vector<16x1xi32>
    %52 = vector.broadcast %51 : vector<16x1xi32> to vector<16x28xi32>
    %53 = arith.cmpi eq, %44, %52 : vector<16x28xi32>
    %54 = arith.extui %53 : vector<16x28xi1> to vector<16x28xi32>
    %55 = arith.sitofp %54 : vector<16x28xi32> to vector<16x28xf32>
    %56 = arith.truncf %55 : vector<16x28xf32> to vector<16x28xbf16>
    %57 = arith.addf %50, %56 : vector<16x28xbf16>
    %58 = vector.extract_strided_slice %43 {offsets = [0, 2], sizes = [16, 1], strides = [1, 1]} : vector<16x3xi32> to vector<16x1xi32>
    %59 = vector.broadcast %58 : vector<16x1xi32> to vector<16x28xi32>
    %60 = arith.cmpi eq, %44, %59 : vector<16x28xi32>
    %61 = arith.extui %60 : vector<16x28xi1> to vector<16x28xi32>
    %62 = arith.sitofp %61 : vector<16x28xi32> to vector<16x28xf32>
    %63 = arith.truncf %62 : vector<16x28xf32> to vector<16x28xbf16>
    %64 = arith.addf %57, %63 : vector<16x28xbf16>
    %c8_5 = arith.constant 8 : index
    %c3_6 = arith.constant 3 : index
    %65 = vector.load %arg0[%c8_5, %c3_6] : memref<24x128xi32, #tpu.memory_space<vmem>>, vector<4x1xi32>
    %66 = tpu.iota {dimensions = array<i32: 1>} : vector<4x16xi32>
    %67 = vector.broadcast %65 : vector<4x1xi32> to vector<4x16xi32>
    %68 = arith.cmpi eq, %66, %67 : vector<4x16xi32>
    %69 = arith.extui %68 : vector<4x16xi1> to vector<4x16xi32>
    %70 = arith.sitofp %69 : vector<4x16xi32> to vector<4x16xf32>
    %71 = arith.truncf %70 : vector<4x16xf32> to vector<4x16xbf16>
    %cst = arith.constant dense<0.000000e+00> : vector<16x16xf32>
    %72 = tpu.matmul %13, %6, %cst {dimension_numbers = #tpu.dot_dimension_numbers<[1], [1], [0], [0], [0, 0, 1, 0], [], []>} : vector<16x40xbf16>, vector<16x40xbf16>, vector<16x16xf32> -> vector<16x16xf32>
    %73 = arith.truncf %72 : vector<16x16xf32> to vector<16x16xbf16>
    %cst_7 = arith.constant dense<0.000000e+00> : vector<16x9xf32>
    %74 = tpu.matmul %13, %35, %cst_7 {dimension_numbers = #tpu.dot_dimension_numbers<[1], [1], [0], [0], [0, 0, 1, 0], [], []>} : vector<16x40xbf16>, vector<9x40xbf16>, vector<16x9xf32> -> vector<16x9xf32>
    %75 = arith.truncf %74 : vector<16x9xf32> to vector<16x9xbf16>
    %c0_8 = arith.constant 0 : index
    %c0_9 = arith.constant 0 : index
    %76 = vector.load %arg1[%c0_8, %c0_9] : memref<320x32xbf16, #tpu.memory_space<vmem>>, vector<28x32xbf16>
    %cst_10 = arith.constant dense<0.000000e+00> : vector<16x32xf32>
    %77 = tpu.matmul %64, %76, %cst_10 {dimension_numbers = #tpu.dot_dimension_numbers<[1], [0], [0], [1], [0, 0, 1, 1], [], []>} : vector<16x28xbf16>, vector<28x32xbf16>, vector<16x32xf32> -> vector<16x32xf32>
    %c32 = arith.constant 32 : index
    %c0_11 = arith.constant 0 : index
    %78 = vector.load %arg1[%c32, %c0_11] : memref<320x32xbf16, #tpu.memory_space<vmem>>, vector<9x32xbf16>
    %c0_12 = arith.constant 0 : index
    %c0_13 = arith.constant 0 : index
    %79 = vector.load %arg2[%c0_12, %c0_13] : memref<96x64xbf16, #tpu.memory_space<vmem>>, vector<32x64xbf16>
    %c32_14 = arith.constant 32 : index
    %c0_15 = arith.constant 0 : index
    %80 = vector.load %arg2[%c32_14, %c0_15] : memref<96x64xbf16, #tpu.memory_space<vmem>>, vector<1x64xbf16>
    %c64 = arith.constant 64 : index
    %c0_16 = arith.constant 0 : index
    %81 = vector.load %arg1[%c64, %c0_16] : memref<320x32xbf16, #tpu.memory_space<vmem>>, vector<64x32xbf16>
    %c192 = arith.constant 192 : index
    %c0_17 = arith.constant 0 : index
    %82 = vector.load %arg1[%c192, %c0_17] : memref<320x32xbf16, #tpu.memory_space<vmem>>, vector<3x32xbf16>
    %cst_18 = arith.constant dense<0.000000e+00> : vector<16x32xf32>
    %83 = tpu.matmul %75, %78, %cst_18 {dimension_numbers = #tpu.dot_dimension_numbers<[1], [0], [0], [1], [0, 0, 1, 1], [], []>} : vector<16x9xbf16>, vector<9x32xbf16>, vector<16x32xf32> -> vector<16x32xf32>
    %84 = arith.truncf %77 : vector<16x32xf32> to vector<16x32xbf16>
    %cst_19 = arith.constant dense<0.000000e+00> : vector<16x32xf32>
    %85 = tpu.matmul %73, %84, %cst_19 {dimension_numbers = #tpu.dot_dimension_numbers<[1], [0], [0], [1], [0, 0, 1, 1], [], []>} : vector<16x16xbf16>, vector<16x32xbf16>, vector<16x32xf32> -> vector<16x32xf32>
    %86 = arith.addf %85, %83 : vector<16x32xf32>
    %87 = arith.truncf %86 : vector<16x32xf32> to vector<16x32xbf16>
    %cst_20 = arith.constant dense<0.000000e+00> : vector<16x64xf32>
    %88 = tpu.matmul %87, %79, %cst_20 {dimension_numbers = #tpu.dot_dimension_numbers<[1], [0], [0], [1], [0, 0, 1, 1], [], []>} : vector<16x32xbf16>, vector<32x64xbf16>, vector<16x64xf32> -> vector<16x64xf32>
    %89 = arith.extf %80 : vector<1x64xbf16> to vector<1x64xf32>
    %90 = vector.broadcast %89 : vector<1x64xf32> to vector<16x64xf32>
    %91 = arith.addf %88, %90 : vector<16x64xf32>
    %cst_21 = arith.constant 0.000000e+00 : f32
    %92 = vector.broadcast %cst_21 : f32 to vector<16x64xf32>
    %93 = arith.maximumf %91, %92 : vector<16x64xf32>
    %94 = arith.truncf %93 : vector<16x64xf32> to vector<16x64xbf16>
    %cst_22 = arith.constant dense<0.000000e+00> : vector<16x32xf32>
    %95 = tpu.matmul %94, %81, %cst_22 {dimension_numbers = #tpu.dot_dimension_numbers<[1], [0], [0], [1], [0, 0, 1, 1], [], []>} : vector<16x64xbf16>, vector<64x32xbf16>, vector<16x32xf32> -> vector<16x32xf32>
    %96 = vector.extract_strided_slice %82 {offsets = [0, 0], sizes = [1, 32], strides = [1, 1]} : vector<3x32xbf16> to vector<1x32xbf16>
    %97 = arith.extf %96 : vector<1x32xbf16> to vector<1x32xf32>
    %98 = vector.broadcast %97 : vector<1x32xf32> to vector<16x32xf32>
    %99 = arith.addf %95, %98 : vector<16x32xf32>
    %cst_23 = arith.constant dense<0.000000e+00> : vector<32xf32>
    %100 = vector.multi_reduction <add>, %99, %cst_23 [0] : vector<16x32xf32> to vector<32xf32>
    %101 = vector.shape_cast %100 : vector<32xf32> to vector<1x32xf32>
    %cst_24 = arith.constant 1.600000e+01 : f32
    %102 = vector.broadcast %cst_24 : f32 to vector<1x32xf32>
    %103 = arith.divf %101, %102 : vector<1x32xf32>
    %104 = vector.broadcast %103 : vector<1x32xf32> to vector<16x32xf32>
    %105 = arith.subf %99, %104 : vector<16x32xf32>
    %106 = arith.mulf %105, %105 : vector<16x32xf32>
    %cst_25 = arith.constant dense<0.000000e+00> : vector<32xf32>
    %107 = vector.multi_reduction <add>, %106, %cst_25 [0] : vector<16x32xf32> to vector<32xf32>
    %108 = vector.shape_cast %107 : vector<32xf32> to vector<1x32xf32>
    %cst_26 = arith.constant 1.600000e+01 : f32
    %109 = vector.broadcast %cst_26 : f32 to vector<1x32xf32>
    %110 = arith.divf %108, %109 : vector<1x32xf32>
    %111 = vector.broadcast %103 : vector<1x32xf32> to vector<16x32xf32>
    %112 = arith.subf %99, %111 : vector<16x32xf32>
    %cst_27 = arith.constant 9.99999974E-6 : f32
    %113 = vector.broadcast %cst_27 : f32 to vector<1x32xf32>
    %114 = arith.addf %110, %113 : vector<1x32xf32>
    %115 = math.rsqrt %114 : vector<1x32xf32>
    %116 = vector.broadcast %115 : vector<1x32xf32> to vector<16x32xf32>
    %117 = arith.mulf %112, %116 : vector<16x32xf32>
    %118 = vector.extract_strided_slice %82 {offsets = [1, 0], sizes = [1, 32], strides = [1, 1]} : vector<3x32xbf16> to vector<1x32xbf16>
    %119 = arith.extf %118 : vector<1x32xbf16> to vector<1x32xf32>
    %120 = vector.broadcast %119 : vector<1x32xf32> to vector<16x32xf32>
    %121 = arith.mulf %117, %120 : vector<16x32xf32>
    %122 = vector.extract_strided_slice %82 {offsets = [2, 0], sizes = [1, 32], strides = [1, 1]} : vector<3x32xbf16> to vector<1x32xbf16>
    %123 = arith.extf %122 : vector<1x32xbf16> to vector<1x32xf32>
    %124 = vector.broadcast %123 : vector<1x32xf32> to vector<16x32xf32>
    %125 = arith.addf %121, %124 : vector<16x32xf32>
    %cst_28 = arith.constant 0.000000e+00 : f32
    %126 = vector.broadcast %cst_28 : f32 to vector<16x32xf32>
    %127 = arith.maximumf %125, %126 : vector<16x32xf32>
    %c48 = arith.constant 48 : index
    %c0_29 = arith.constant 0 : index
    %128 = vector.load %arg1[%c48, %c0_29] : memref<320x32xbf16, #tpu.memory_space<vmem>>, vector<9x32xbf16>
    %c48_30 = arith.constant 48 : index
    %c0_31 = arith.constant 0 : index
    %129 = vector.load %arg2[%c48_30, %c0_31] : memref<96x64xbf16, #tpu.memory_space<vmem>>, vector<32x64xbf16>
    %c80 = arith.constant 80 : index
    %c0_32 = arith.constant 0 : index
    %130 = vector.load %arg2[%c80, %c0_32] : memref<96x64xbf16, #tpu.memory_space<vmem>>, vector<1x64xbf16>
    %c128 = arith.constant 128 : index
    %c0_33 = arith.constant 0 : index
    %131 = vector.load %arg1[%c128, %c0_33] : memref<320x32xbf16, #tpu.memory_space<vmem>>, vector<64x32xbf16>
    %c208 = arith.constant 208 : index
    %c0_34 = arith.constant 0 : index
    %132 = vector.load %arg1[%c208, %c0_34] : memref<320x32xbf16, #tpu.memory_space<vmem>>, vector<3x32xbf16>
    %cst_35 = arith.constant dense<0.000000e+00> : vector<16x32xf32>
    %133 = tpu.matmul %75, %128, %cst_35 {dimension_numbers = #tpu.dot_dimension_numbers<[1], [0], [0], [1], [0, 0, 1, 1], [], []>} : vector<16x9xbf16>, vector<9x32xbf16>, vector<16x32xf32> -> vector<16x32xf32>
    %134 = arith.truncf %127 : vector<16x32xf32> to vector<16x32xbf16>
    %cst_36 = arith.constant dense<0.000000e+00> : vector<16x32xf32>
    %135 = tpu.matmul %73, %134, %cst_36 {dimension_numbers = #tpu.dot_dimension_numbers<[1], [0], [0], [1], [0, 0, 1, 1], [], []>} : vector<16x16xbf16>, vector<16x32xbf16>, vector<16x32xf32> -> vector<16x32xf32>
    %136 = arith.addf %135, %133 : vector<16x32xf32>
    %137 = arith.truncf %136 : vector<16x32xf32> to vector<16x32xbf16>
    %cst_37 = arith.constant dense<0.000000e+00> : vector<16x64xf32>
    %138 = tpu.matmul %137, %129, %cst_37 {dimension_numbers = #tpu.dot_dimension_numbers<[1], [0], [0], [1], [0, 0, 1, 1], [], []>} : vector<16x32xbf16>, vector<32x64xbf16>, vector<16x64xf32> -> vector<16x64xf32>
    %139 = arith.extf %130 : vector<1x64xbf16> to vector<1x64xf32>
    %140 = vector.broadcast %139 : vector<1x64xf32> to vector<16x64xf32>
    %141 = arith.addf %138, %140 : vector<16x64xf32>
    %cst_38 = arith.constant 0.000000e+00 : f32
    %142 = vector.broadcast %cst_38 : f32 to vector<16x64xf32>
    %143 = arith.maximumf %141, %142 : vector<16x64xf32>
    %144 = arith.truncf %143 : vector<16x64xf32> to vector<16x64xbf16>
    %cst_39 = arith.constant dense<0.000000e+00> : vector<16x32xf32>
    %145 = tpu.matmul %144, %131, %cst_39 {dimension_numbers = #tpu.dot_dimension_numbers<[1], [0], [0], [1], [0, 0, 1, 1], [], []>} : vector<16x64xbf16>, vector<64x32xbf16>, vector<16x32xf32> -> vector<16x32xf32>
    %146 = vector.extract_strided_slice %132 {offsets = [0, 0], sizes = [1, 32], strides = [1, 1]} : vector<3x32xbf16> to vector<1x32xbf16>
    %147 = arith.extf %146 : vector<1x32xbf16> to vector<1x32xf32>
    %148 = vector.broadcast %147 : vector<1x32xf32> to vector<16x32xf32>
    %149 = arith.addf %145, %148 : vector<16x32xf32>
    %cst_40 = arith.constant dense<0.000000e+00> : vector<32xf32>
    %150 = vector.multi_reduction <add>, %149, %cst_40 [0] : vector<16x32xf32> to vector<32xf32>
    %151 = vector.shape_cast %150 : vector<32xf32> to vector<1x32xf32>
    %cst_41 = arith.constant 1.600000e+01 : f32
    %152 = vector.broadcast %cst_41 : f32 to vector<1x32xf32>
    %153 = arith.divf %151, %152 : vector<1x32xf32>
    %154 = vector.broadcast %153 : vector<1x32xf32> to vector<16x32xf32>
    %155 = arith.subf %149, %154 : vector<16x32xf32>
    %156 = arith.mulf %155, %155 : vector<16x32xf32>
    %cst_42 = arith.constant dense<0.000000e+00> : vector<32xf32>
    %157 = vector.multi_reduction <add>, %156, %cst_42 [0] : vector<16x32xf32> to vector<32xf32>
    %158 = vector.shape_cast %157 : vector<32xf32> to vector<1x32xf32>
    %cst_43 = arith.constant 1.600000e+01 : f32
    %159 = vector.broadcast %cst_43 : f32 to vector<1x32xf32>
    %160 = arith.divf %158, %159 : vector<1x32xf32>
    %161 = vector.broadcast %153 : vector<1x32xf32> to vector<16x32xf32>
    %162 = arith.subf %149, %161 : vector<16x32xf32>
    %cst_44 = arith.constant 9.99999974E-6 : f32
    %163 = vector.broadcast %cst_44 : f32 to vector<1x32xf32>
    %164 = arith.addf %160, %163 : vector<1x32xf32>
    %165 = math.rsqrt %164 : vector<1x32xf32>
    %166 = vector.broadcast %165 : vector<1x32xf32> to vector<16x32xf32>
    %167 = arith.mulf %162, %166 : vector<16x32xf32>
    %168 = vector.extract_strided_slice %132 {offsets = [1, 0], sizes = [1, 32], strides = [1, 1]} : vector<3x32xbf16> to vector<1x32xbf16>
    %169 = arith.extf %168 : vector<1x32xbf16> to vector<1x32xf32>
    %170 = vector.broadcast %169 : vector<1x32xf32> to vector<16x32xf32>
    %171 = arith.mulf %167, %170 : vector<16x32xf32>
    %172 = vector.extract_strided_slice %132 {offsets = [2, 0], sizes = [1, 32], strides = [1, 1]} : vector<3x32xbf16> to vector<1x32xbf16>
    %173 = arith.extf %172 : vector<1x32xbf16> to vector<1x32xf32>
    %174 = vector.broadcast %173 : vector<1x32xf32> to vector<16x32xf32>
    %175 = arith.addf %171, %174 : vector<16x32xf32>
    %176 = arith.truncf %175 : vector<16x32xf32> to vector<16x32xbf16>
    %cst_45 = arith.constant dense<0.000000e+00> : vector<2x32xf32>
    %177 = tpu.matmul %42, %176, %cst_45 {dimension_numbers = #tpu.dot_dimension_numbers<[1], [0], [0], [1], [0, 0, 1, 1], [], []>} : vector<2x16xbf16>, vector<16x32xbf16>, vector<2x32xf32> -> vector<2x32xf32>
    %178 = arith.extf %42 : vector<2x16xbf16> to vector<2x16xf32>
    %cst_46 = arith.constant dense<0.000000e+00> : vector<2xf32>
    %179 = vector.multi_reduction <add>, %178, %cst_46 [1] : vector<2x16xf32> to vector<2xf32>
    %180 = vector.shape_cast %179 : vector<2xf32> to vector<2x1xf32>
    %cst_47 = arith.constant 1.000000e+00 : f32
    %181 = vector.broadcast %cst_47 : f32 to vector<2x1xf32>
    %182 = arith.maximumf %180, %181 : vector<2x1xf32>
    %183 = vector.broadcast %182 : vector<2x1xf32> to vector<2x32xf32>
    %184 = arith.divf %177, %183 : vector<2x32xf32>
    %cst_48 = arith.constant dense<0.000000e+00> : vector<4x32xf32>
    %185 = tpu.matmul %71, %176, %cst_48 {dimension_numbers = #tpu.dot_dimension_numbers<[1], [0], [0], [1], [0, 0, 1, 1], [], []>} : vector<4x16xbf16>, vector<16x32xbf16>, vector<4x32xf32> -> vector<4x32xf32>
    %c256 = arith.constant 256 : index
    %c0_49 = arith.constant 0 : index
    %186 = vector.load %arg1[%c256, %c0_49] : memref<320x32xbf16, #tpu.memory_space<vmem>>, vector<3x32xbf16>
    %187 = arith.truncf %185 : vector<4x32xf32> to vector<4x32xbf16>
    %c224 = arith.constant 224 : index
    %c0_50 = arith.constant 0 : index
    %188 = vector.load %arg1[%c224, %c0_50] : memref<320x32xbf16, #tpu.memory_space<vmem>>, vector<32x32xbf16>
    %cst_51 = arith.constant dense<0.000000e+00> : vector<4x32xf32>
    %189 = tpu.matmul %187, %188, %cst_51 {dimension_numbers = #tpu.dot_dimension_numbers<[1], [0], [0], [1], [0, 0, 1, 1], [], []>} : vector<4x32xbf16>, vector<32x32xbf16>, vector<4x32xf32> -> vector<4x32xf32>
    %190 = vector.extract_strided_slice %186 {offsets = [0, 0], sizes = [1, 32], strides = [1, 1]} : vector<3x32xbf16> to vector<1x32xbf16>
    %191 = arith.extf %190 : vector<1x32xbf16> to vector<1x32xf32>
    %192 = vector.broadcast %191 : vector<1x32xf32> to vector<4x32xf32>
    %193 = arith.addf %189, %192 : vector<4x32xf32>
    %cst_52 = arith.constant 0.000000e+00 : f32
    %194 = vector.broadcast %cst_52 : f32 to vector<4x32xf32>
    %195 = arith.maximumf %193, %194 : vector<4x32xf32>
    %cst_53 = arith.constant dense<0.000000e+00> : vector<4xf32>
    %196 = vector.multi_reduction <add>, %195, %cst_53 [1] : vector<4x32xf32> to vector<4xf32>
    %197 = vector.shape_cast %196 : vector<4xf32> to vector<4x1xf32>
    %cst_54 = arith.constant 3.200000e+01 : f32
    %198 = vector.broadcast %cst_54 : f32 to vector<4x1xf32>
    %199 = arith.divf %197, %198 : vector<4x1xf32>
    %200 = vector.broadcast %199 : vector<4x1xf32> to vector<4x32xf32>
    %201 = arith.subf %195, %200 : vector<4x32xf32>
    %202 = arith.mulf %201, %201 : vector<4x32xf32>
    %cst_55 = arith.constant dense<0.000000e+00> : vector<4xf32>
    %203 = vector.multi_reduction <add>, %202, %cst_55 [1] : vector<4x32xf32> to vector<4xf32>
    %204 = vector.shape_cast %203 : vector<4xf32> to vector<4x1xf32>
    %cst_56 = arith.constant 3.200000e+01 : f32
    %205 = vector.broadcast %cst_56 : f32 to vector<4x1xf32>
    %206 = arith.divf %204, %205 : vector<4x1xf32>
    %207 = vector.broadcast %199 : vector<4x1xf32> to vector<4x32xf32>
    %208 = arith.subf %195, %207 : vector<4x32xf32>
    %cst_57 = arith.constant 9.99999974E-6 : f32
    %209 = vector.broadcast %cst_57 : f32 to vector<4x1xf32>
    %210 = arith.addf %206, %209 : vector<4x1xf32>
    %211 = math.rsqrt %210 : vector<4x1xf32>
    %212 = vector.broadcast %211 : vector<4x1xf32> to vector<4x32xf32>
    %213 = arith.mulf %208, %212 : vector<4x32xf32>
    %214 = vector.extract_strided_slice %186 {offsets = [1, 0], sizes = [1, 32], strides = [1, 1]} : vector<3x32xbf16> to vector<1x32xbf16>
    %215 = arith.extf %214 : vector<1x32xbf16> to vector<1x32xf32>
    %216 = vector.broadcast %215 : vector<1x32xf32> to vector<4x32xf32>
    %217 = arith.mulf %213, %216 : vector<4x32xf32>
    %218 = vector.extract_strided_slice %186 {offsets = [2, 0], sizes = [1, 32], strides = [1, 1]} : vector<3x32xbf16> to vector<1x32xbf16>
    %219 = arith.extf %218 : vector<1x32xbf16> to vector<1x32xf32>
    %220 = vector.broadcast %219 : vector<1x32xf32> to vector<4x32xf32>
    %221 = arith.addf %217, %220 : vector<4x32xf32>
    %222 = arith.truncf %221 : vector<4x32xf32> to vector<4x32xbf16>
    %c272 = arith.constant 272 : index
    %c0_58 = arith.constant 0 : index
    %223 = vector.load %arg1[%c272, %c0_58] : memref<320x32xbf16, #tpu.memory_space<vmem>>, vector<32x32xbf16>
    %cst_59 = arith.constant dense<0.000000e+00> : vector<4x32xf32>
    %224 = tpu.matmul %222, %223, %cst_59 {dimension_numbers = #tpu.dot_dimension_numbers<[1], [0], [0], [1], [0, 0, 1, 1], [], []>} : vector<4x32xbf16>, vector<32x32xbf16>, vector<4x32xf32> -> vector<4x32xf32>
    %c304 = arith.constant 304 : index
    %c0_60 = arith.constant 0 : index
    %225 = vector.load %arg1[%c304, %c0_60] : memref<320x32xbf16, #tpu.memory_space<vmem>>, vector<1x32xbf16>
    %226 = arith.extf %225 : vector<1x32xbf16> to vector<1x32xf32>
    %227 = vector.broadcast %226 : vector<1x32xf32> to vector<4x32xf32>
    %228 = arith.addf %224, %227 : vector<4x32xf32>
    %cst_61 = arith.constant 0.000000e+00 : f32
    %229 = vector.broadcast %cst_61 : f32 to vector<14x32xf32>
    %230 = tpu.concatenate %184, %229 in 0 : vector<2x32xf32>, vector<14x32xf32> -> vector<16x32xf32>
    %cst_62 = arith.constant 0.000000e+00 : f32
    %231 = vector.broadcast %cst_62 : f32 to vector<12x32xf32>
    %232 = tpu.concatenate %228, %231 in 0 : vector<4x32xf32>, vector<12x32xf32> -> vector<16x32xf32>
    %cst_63 = arith.constant 0.000000e+00 : f32
    %233 = vector.broadcast %cst_63 : f32 to vector<16x32xf32>
    %234 = tpu.concatenate %175, %230, %232, %233 in 1 : vector<16x32xf32>, vector<16x32xf32>, vector<16x32xf32>, vector<16x32xf32> -> vector<16x128xf32>
    %c0_64 = arith.constant 0 : index
    %c0_65 = arith.constant 0 : index
    %235 = vector.load %arg3[%c0_64, %c0_65] : memref<16x128xf32, #tpu.memory_space<vmem>>, vector<16x128xf32>
    tpu.vector_store %arg3[%c0_64, %c0_65], %234 {strides = array<i32>} : memref<16x128xf32, #tpu.memory_space<vmem>>, vector<16x128xf32>,
    return
  }
}

</mosaic_0001>

<llo_original>
// kernel: tpu_custom_call.1
$region0: #{tpu_custom_call.1}
  #allocation0 [shape = 'u32[]', space=smem, size = 0x4, offset = 0x4, fixed_abs, tag = 'smem constant byte address 0x4 - core index']
  #allocation1 [shape = 'u32[144,128]{1,0:T(1,128)}', space=vmem, size = 0x12000, scoped, tag = 'internal scratch']
  %s0 = inlined_call_operand.vmem [shape: s32[24,128], index: 0, kind: input, shape index: {}]
  %s1 = inlined_call_operand.vmem [shape: bf16[320,32], index: 1, kind: input, shape index: {}]
  %s2 = inlined_call_operand.vmem [shape: bf16[96,64], index: 2, kind: input, shape index: {}]
  %s3 = inlined_call_operand.hbm [shape: f32[16,128], index: 3, kind: output, shape index: {}]
  %s4 = sld [smem:[#allocation0]]
  $region22: #{tpu_custom_call.1} parent=0
    _
  %s6 = ssub.s32 1, %s4
  %s7 = scalar_select 0, %s6, %s4
  $region1: #{tpu_custom_call.1} parent=0
    #allocation2 [shape = 'u8[8192]{0}', space=vmem, size = 0x2000, scoped, tag = 'output window, operand 0, single buffered']
    #allocation3 [shape = 's32[1]{0}', space=sflag, size = 0x4, scoped, tag = 'scoped memory for tpu_custom_call.1']
    %8 = vsyncpa [#allocation3], 0
    // Predicated region
    $region2: #{tpu_custom_call.1} parent=1 // pred_check
      _
    $region3: #{tpu_custom_call.1} parent=1 // pred_check_branch
      %10 = sbr.rel (0) target = $region5
    $region4: #{tpu_custom_call.1} parent=1 // pred_region
      _
    $region5: #{tpu_custom_call.1} parent=1 // pred_fallthru
      _
    // Predicated region
    $region6: #{tpu_custom_call.1} parent=1 // pred_check
      _
    $region7: #{tpu_custom_call.1} parent=1 // pred_check_branch
      %12 = sbr.rel (0) target = $region9
    $region8: #{tpu_custom_call.1} parent=1 // pred_region
      _
    $region9: #{tpu_custom_call.1} parent=1 // pred_fallthru
      _
    // Predicated region
    $region10: #{tpu_custom_call.1} parent=1 // pred_check
      _
    $region11: #{tpu_custom_call.1} parent=1 // pred_check_branch
      %14 = sbr.rel (0) target = $region13
    $region12: #{tpu_custom_call.1} parent=1 // pred_region
      _
    $region13: #{tpu_custom_call.1} parent=1 // pred_fallthru
      _
    %v16 = vld [vmem:[%s0] sm:$0x1]
    %v17 = vlaneseq
    %v18 = vshrl.u32 %v17, 7
    %v19 = vadd.s32 %v18, 8
    %v20 = vlaneseq
    %v21 = vshrl.u32 %v20, 7
    %v22 = vsub.s32 0, %v21
    %v23 = vrot.slane %v16, %v22
    %vm24 = vcmp.eq.s32.totalorder %v18, %v23
    %vm25 = vcmp.eq.s32.totalorder %v19, %v23
    %v26 = vsel %vm24, 1, 0
    %v27 = vsel %vm25, 1, 0
    %v28 = vcvt.s32.f32 %v26
    %v29 = vcvt.s32.f32 %v27
    %v30 = vpack.c.bf16 %v29, %v28
    %v31 = vld [vmem:[%s0 + $0x1] sm:$0x1]
    %v32 = vlaneseq
    %v33 = vshrl.u32 %v32, 7
    %v34 = vsub.s32 0, %v33
    %v35 = vrot.slane %v31, %v34
    %vm36 = vcmp.eq.s32.totalorder %v18, %v35
    %vm37 = vcmp.eq.s32.totalorder %v19, %v35
    %v38 = vsel %vm36, 1, 0
    %v39 = vsel %vm37, 1, 0
    %v40 = vcvt.s32.f32 %v38
    %v41 = vcvt.s32.f32 %v39
    %v42 = vpack.c.bf16 %v41, %v40
    %v43 = vld [vmem:[%s0 + $0x3] sm:$0x7]
    %v44 = vlaneseq
    %v45 = vshrl.u32 %v44, 7
    %v46 = vsub.s32 0, %v45
    %v47 = vrot.slane %v43, %v46
    %vm48 = vcmp.eq.s32.totalorder %v18, %v47
    %vm49 = vcmp.eq.s32.totalorder %v19, %v47
    %v50 = vsel %vm48, 1, 0
    %v51 = vsel %vm49, 1, 0
    %v52 = vcvt.s32.f32 %v50
    %v53 = vcvt.s32.f32 %v51
    %v54 = vpack.c.bf16 %v53, %v52
    %v55 = vlaneseq
    %v56 = vshrl.u32 %v55, 7
    %v57 = vsub.s32 1, %v56
    %v58 = vrot.slane %v43, %v57
    %vm59 = vcmp.eq.s32.totalorder %v18, %v58
    %vm60 = vcmp.eq.s32.totalorder %v19, %v58
    %v61 = vsel %vm59, 1, 0
    %v62 = vsel %vm60, 1, 0
    %v63 = vcvt.s32.f32 %v61
    %v64 = vcvt.s32.f32 %v62
    %v65 = vpack.c.bf16 %v64, %v63
    %v66 = vadd.bf16 %v54, %v65
    %v67 = vlaneseq
    %v68 = vshrl.u32 %v67, 7
    %v69 = vsub.s32 2, %v68
    %v70 = vrot.slane %v43, %v69
    %vm71 = vcmp.eq.s32.totalorder %v18, %v70
    %vm72 = vcmp.eq.s32.totalorder %v19, %v70
    %v73 = vsel %vm71, 1, 0
    %v74 = vsel %vm72, 1, 0
    %v75 = vcvt.s32.f32 %v73
    %v76 = vcvt.s32.f32 %v74
    %v77 = vpack.c.bf16 %v76, %v75
    %v78 = vadd.bf16 %v66, %v77
    %v79 = vld [vmem:[%s0 + $0x2] sm:$0x1]
    %v80 = vlaneseq
    %v81 = vshrl.u32 %v80, 7
    %v82 = vsub.s32 0, %v81
    %v83 = vrot.slane %v79, %v82
    %vm84 = vcmp.eq.s32.totalorder %v18, %v83
    %v85 = vsel %vm84, 1, 0
    %v86 = vcvt.s32.f32 %v85
    %v87 = vpack.c.bf16 %v86, %v86
    %v88 = vld [vmem:[%s0 + $0x8] sm:$0xff]
    %v89 = vld [vmem:[%s0 + $0x10] sm:$0xff]
    %v90 = vlaneseq
    %v91 = vand.u32 %v90, 127
    %92 = vset.pattern.permute.xlu0 0
    %93 = vperm.xlu0 %92, %v88
    %v94 = vpop.permute.xlu0 %93
    %95 = vset.pattern.permute.xlu0 0
    %96 = vperm.xlu0 %95, %v89
    %v97 = vpop.permute.xlu0 %96
    %vm98 = vcmp.eq.s32.totalorder %v91, %v94
    %vm99 = vcmp.eq.s32.totalorder %v91, %v97
    %v100 = vsel %vm98, 1, 0
    %v101 = vsel %vm99, 1, 0
    %v102 = vcvt.s32.f32 %v100
    %v103 = vcvt.s32.f32 %v101
    %v104 = vpack.c.bf16 %v103, %v102
    %105 = vset.pattern.permute.xlu0 1
    %106 = vperm.xlu0 %105, %v88
    %v107 = vpop.permute.xlu0 %106
    %108 = vset.pattern.permute.xlu0 1
    %109 = vperm.xlu0 %108, %v89
    %v110 = vpop.permute.xlu0 %109
    %vm111 = vcmp.eq.s32.totalorder %v91, %v107
    %vm112 = vcmp.eq.s32.totalorder %v91, %v110
    %v113 = vsel %vm111, 1, 0
    %v114 = vsel %vm112, 1, 0
    %v115 = vcvt.s32.f32 %v113
    %v116 = vcvt.s32.f32 %v114
    %v117 = vpack.c.bf16 %v116, %v115
    %v118 = vadd.bf16 %v104, %v117
    %119 = vset.pattern.permute.xlu0 2
    %120 = vperm.xlu0 %119, %v88
    %v121 = vpop.permute.xlu0 %120
    %122 = vset.pattern.permute.xlu0 2
    %123 = vperm.xlu0 %122, %v89
    %v124 = vpop.permute.xlu0 %123
    %vm125 = vcmp.eq.s32.totalorder %v91, %v121
    %vm126 = vcmp.eq.s32.totalorder %v91, %v124
    %v127 = vsel %vm125, 1, 0
    %v128 = vsel %vm126, 1, 0
    %v129 = vcvt.s32.f32 %v127
    %v130 = vcvt.s32.f32 %v128
    %v131 = vpack.c.bf16 %v130, %v129
    %v132 = vadd.bf16 %v118, %v131
    %v133 = vld [vmem:[%s0 + $0x8] sm:$0xf]
    %134 = vset.pattern.permute.xlu0 3
    %135 = vperm.xlu0 %134, %v133
    %v136 = vpop.permute.xlu0 %135
    %vm137 = vcmp.eq.s32.totalorder %v91, %v136
    %v138 = vsel %vm137, 1, 0
    %v139 = vcvt.s32.f32 %v138
    %v140 = vpack.c.bf16 %v139, %v139
    %vm141 = vcmask 326656
    %v143 = vsel %vm141, %v42, 0
    %v146 = vsel %vm141, %v30, 0
    %148 = vmatprep.subr.bf16.mxu0 0
    %149 = vmatpush1.bf16.xpose.msra.mxu0 0
    %150 = vmatprep.subr.bf16.mxu0 0
    %151 = vmatpush1.bf16.xpose.msra.mxu0 0
    %152 = vmatprep.subr.bf16.mxu0 0
    %153 = vmatpush1.bf16.xpose.msra.mxu0 0
    %154 = vmatprep.subr.bf16.mxu0 0
    %155 = vmatpush1.bf16.xpose.msra.mxu0 0
    %156 = vmatprep.subr.bf16.mxu0 0
    %157 = vmatpush1.bf16.xpose.msra.mxu0 0
    %158 = vmatprep.subr.bf16.mxu0 0
    %159 = vmatpush1.bf16.xpose.msra.mxu0 0
    %160 = vmatprep.subr.bf16.mxu0 0
    %161 = vmatpush1.bf16.xpose.msra.mxu0 0
    %162 = vmatprep.subr.bf16.mxu0 0
    %163 = vmatpush1.bf16.xpose.msra.mxu0 %v146
    %164 = vmatprep.subr.bf16.mxu0 0
    %165 = vmatpush2.bf16.xpose.msra.mxu0 0
    %166 = vmatprep.subr.bf16.mxu0 0
    %167 = vmatpush2.bf16.xpose.msra.mxu0 0
    %168 = vmatprep.subr.bf16.mxu0 0
    %169 = vmatpush2.bf16.xpose.msra.mxu0 0
    %170 = vmatprep.subr.bf16.mxu0 0
    %171 = vmatpush2.bf16.xpose.msra.mxu0 0
    %172 = vmatprep.subr.bf16.mxu0 0
    %173 = vmatpush2.bf16.xpose.msra.mxu0 0
    %174 = vmatprep.subr.bf16.mxu0 0
    %175 = vmatpush2.bf16.xpose.msra.mxu0 0
    %176 = vmatprep.subr.bf16.mxu0 0
    %177 = vmatpush2.bf16.xpose.msra.mxu0 0
    %178 = vmatprep.subr.bf16.mxu0 0
    %179 = vmatpush2.bf16.xpose.msra.mxu0 0
    %180 = vmatprep.mubr.bf16.mxu0 0
    %181 = vmatmul.mubr.bf16.gmra.mxu0 %v143
    %v182 = vpop.f32.mrf.mxu0
    %v183 = vadd.f32 0.0, %v182
    %v184 = vpop.f32.mrf.mxu0
    %v185 = vpop.f32.mrf.mxu0
    %v186 = vadd.f32 0.0, %v185
    %v187 = vpop.f32.mrf.mxu0
    %188 = vdwg.mxu0
    %v189 = vpack.c.bf16 %v186, %v183
    %v191 = vsel %vm141, %v78, 0
    %193 = vmatprep.subr.bf16.mxu0 0
    %194 = vmatpush1.bf16.xpose.msra.mxu0 0
    %195 = vmatprep.subr.bf16.mxu0 0
    %196 = vmatpush1.bf16.xpose.msra.mxu0 0
    %197 = vmatprep.subr.bf16.mxu0 0
    %198 = vmatpush1.bf16.xpose.msra.mxu0 0
    %199 = vmatprep.subr.bf16.mxu0 0
    %200 = vmatpush1.bf16.xpose.msra.mxu0 0
    %201 = vmatprep.subr.bf16.mxu0 0
    %202 = vmatpush1.bf16.xpose.msra.mxu0 0
    %203 = vmatprep.subr.bf16.mxu0 0
    %204 = vmatpush1.bf16.xpose.msra.mxu0 0
    %205 = vmatprep.subr.bf16.mxu0 0
    %206 = vmatpush1.bf16.xpose.msra.mxu0 0
    %207 = vmatprep.subr.bf16.mxu0 0
    %208 = vmatpush1.bf16.xpose.msra.mxu0 %v191
    %209 = vmatprep.subr.bf16.mxu0 0
    %210 = vmatpush2.bf16.xpose.msra.mxu0 0
    %211 = vmatprep.subr.bf16.mxu0 0
    %212 = vmatpush2.bf16.xpose.msra.mxu0 0
    %213 = vmatprep.subr.bf16.mxu0 0
    %214 = vmatpush2.bf16.xpose.msra.mxu0 0
    %215 = vmatprep.subr.bf16.mxu0 0
    %216 = vmatpush2.bf16.xpose.msra.mxu0 0
    %217 = vmatprep.subr.bf16.mxu0 0
    %218 = vmatpush2.bf16.xpose.msra.mxu0 0
    %219 = vmatprep.subr.bf16.mxu0 0
    %220 = vmatpush2.bf16.xpose.msra.mxu0 0
    %221 = vmatprep.subr.bf16.mxu0 0
    %222 = vmatpush2.bf16.xpose.msra.mxu0 0
    %223 = vmatprep.subr.bf16.mxu0 0
    %224 = vmatpush2.bf16.xpose.msra.mxu0 0
    %225 = vmatprep.mubr.bf16.mxu0 0
    %226 = vmatmul.mubr.bf16.gmra.mxu0 %v143
    %v227 = vpop.f32.mrf.mxu0
    %v228 = vadd.f32 0.0, %v227
    %v229 = vpop.f32.mrf.mxu0
    %v230 = vpop.f32.mrf.mxu0
    %v231 = vadd.f32 0.0, %v230
    %v232 = vpop.f32.mrf.mxu0
    %233 = vdwg.mxu0
    %v234 = vpack.c.bf16 %v231, %v228
    %v235 = vld [vmem:[%s1] sm:$0xf]
    %v236 = vld [vmem:[%s1 + $0x4] sm:$0xf]
    %v237 = vld [vmem:[%s1 + $0x8] sm:$0xf]
    %v238 = vld [vmem:[%s1 + $0xc] sm:$0x3]
    %v243 = vunpack.c.l.b16 %v235
    %v244 = vunpack.c.l.b16 %v236
    %v245 = vunpack.c.l.b16 %v237
    %v246 = vunpack.c.l.b16 %v238
    %v247 = vpack.c.b16 %v244, %v243
    %v248 = vpack.c.b16 %v246, %v245
    %vm250 = vcmask 228352
    %v252 = vsel %vm250, %v132, 0
    %vm254 = vcmask 1045504
    %v256 = vsel %vm254, %v248, 0
    %258 = vmatprep.subr.bf16.mxu0 0
    %259 = vmatpush1.bf16.msra.mxu0 0
    %260 = vmatprep.subr.bf16.mxu0 0
    %261 = vmatpush1.bf16.msra.mxu0 0
    %262 = vmatprep.subr.bf16.mxu0 0
    %263 = vmatpush1.bf16.msra.mxu0 0
    %264 = vmatprep.subr.bf16.mxu0 0
    %265 = vmatpush1.bf16.msra.mxu0 0
    %266 = vmatprep.subr.bf16.mxu0 0
    %267 = vmatpush1.bf16.msra.mxu0 0
    %268 = vmatprep.subr.bf16.mxu0 0
    %269 = vmatpush1.bf16.msra.mxu0 0
    %270 = vmatprep.subr.bf16.mxu0 0
    %271 = vmatpush1.bf16.msra.mxu0 %v256
    %272 = vmatprep.subr.bf16.mxu0 0
    %273 = vmatpush1.bf16.msra.mxu0 %v247
    %274 = vmatprep.subr.bf16.mxu0 0
    %275 = vmatpush2.bf16.msra.mxu0 0
    %276 = vmatprep.subr.bf16.mxu0 0
    %277 = vmatpush2.bf16.msra.mxu0 0
    %278 = vmatprep.subr.bf16.mxu0 0
    %279 = vmatpush2.bf16.msra.mxu0 0
    %280 = vmatprep.subr.bf16.mxu0 0
    %281 = vmatpush2.bf16.msra.mxu0 0
    %282 = vmatprep.subr.bf16.mxu0 0
    %283 = vmatpush2.bf16.msra.mxu0 0
    %284 = vmatprep.subr.bf16.mxu0 0
    %285 = vmatpush2.bf16.msra.mxu0 0
    %286 = vmatprep.subr.bf16.mxu0 0
    %287 = vmatpush2.bf16.msra.mxu0 0
    %288 = vmatprep.subr.bf16.mxu0 0
    %289 = vmatpush2.bf16.msra.mxu0 0
    %290 = vmatprep.mubr.bf16.mxu0 0
    %291 = vmatmul.mubr.bf16.gmra.mxu0 %v252
    %v292 = vpop.f32.mrf.mxu0
    %v293 = vadd.f32 0.0, %v292
    %v294 = vpop.f32.mrf.mxu0
    %v295 = vpop.f32.mrf.mxu0
    %v296 = vadd.f32 0.0, %v295
    %v297 = vpop.f32.mrf.mxu0
    %298 = vdwg.mxu0
    %v299 = vld [vmem:[%s1 + $0x10] sm:$0xf]
    %v300 = vld [vmem:[%s1 + $0x14] sm:$0x1]
    %v301 = vld [vmem:[%s2] sm:$0xf]
    %v302 = vld [vmem:[%s2 + $0x4] sm:$0xf]
    %v303 = vld [vmem:[%s2 + $0x8] sm:$0xf]
    %v304 = vld [vmem:[%s2 + $0xc] sm:$0xf]
    %v305 = vld [vmem:[%s2 + $0x10] sm:$0x1]
    %v306 = vld [vmem:[%s1 + $0x20] sm:$0xf]
    %v307 = vld [vmem:[%s1 + $0x24] sm:$0xf]
    %v308 = vld [vmem:[%s1 + $0x28] sm:$0xf]
    %v309 = vld [vmem:[%s1 + $0x2c] sm:$0xf]
    %v310 = vld [vmem:[%s1 + $0x30] sm:$0xf]
    %v311 = vld [vmem:[%s1 + $0x34] sm:$0xf]
    %v312 = vld [vmem:[%s1 + $0x38] sm:$0xf]
    %v313 = vld [vmem:[%s1 + $0x3c] sm:$0xf]
    %v314 = vld [vmem:[%s1 + $0x60] sm:$0x3]
    %v317 = vunpack.c.l.b16 %v299
    %v318 = vunpack.c.l.b16 %v300
    %v319 = vpack.c.b16 %v318, %v317
    %vm320 = vcmask 72704
    %v322 = vsel %vm320, %v234, 0
    %vm324 = vcmask 1043456
    %vm325 = vcmask 1044480
    %v326 = vsel %vm324, 4294967295, 65535
    %v327 = vsel %vm325, %v326, 0
    %v329 = vand.u32 %v319, %v327
    %331 = vmatprep.subr.bf16.mxu0 0
    %332 = vmatpush1.bf16.msra.mxu0 0
    %333 = vmatprep.subr.bf16.mxu0 0
    %334 = vmatpush1.bf16.msra.mxu0 0
    %335 = vmatprep.subr.bf16.mxu0 0
    %336 = vmatpush1.bf16.msra.mxu0 0
    %337 = vmatprep.subr.bf16.mxu0 0
    %338 = vmatpush1.bf16.msra.mxu0 0
    %339 = vmatprep.subr.bf16.mxu0 0
    %340 = vmatpush1.bf16.msra.mxu0 0
    %341 = vmatprep.subr.bf16.mxu0 0
    %342 = vmatpush1.bf16.msra.mxu0 0
    %343 = vmatprep.subr.bf16.mxu0 0
    %344 = vmatpush1.bf16.msra.mxu0 0
    %345 = vmatprep.subr.bf16.mxu0 0
    %346 = vmatpush1.bf16.msra.mxu0 %v329
    %347 = vmatprep.subr.bf16.mxu0 0
    %348 = vmatpush2.bf16.msra.mxu0 0
    %349 = vmatprep.subr.bf16.mxu0 0
    %350 = vmatpush2.bf16.msra.mxu0 0
    %351 = vmatprep.subr.bf16.mxu0 0
    %352 = vmatpush2.bf16.msra.mxu0 0
    %353 = vmatprep.subr.bf16.mxu0 0
    %354 = vmatpush2.bf16.msra.mxu0 0
    %355 = vmatprep.subr.bf16.mxu0 0
    %356 = vmatpush2.bf16.msra.mxu0 0
    %357 = vmatprep.subr.bf16.mxu0 0
    %358 = vmatpush2.bf16.msra.mxu0 0
    %359 = vmatprep.subr.bf16.mxu0 0
    %360 = vmatpush2.bf16.msra.mxu0 0
    %361 = vmatprep.subr.bf16.mxu0 0
    %362 = vmatpush2.bf16.msra.mxu0 0
    %363 = vmatprep.mubr.bf16.mxu0 0
    %364 = vmatmul.mubr.bf16.gmra.mxu0 %v322
    %v365 = vpop.f32.mrf.mxu0
    %v366 = vadd.f32 0.0, %v365
    %v367 = vpop.f32.mrf.mxu0
    %v368 = vpop.f32.mrf.mxu0
    %v369 = vadd.f32 0.0, %v368
    %v370 = vpop.f32.mrf.mxu0
    %371 = vdwg.mxu0
    %v372 = vpack.c.bf16 %v296, %v293
    %vm373 = vcmask 130048
    %v375 = vsel %vm373, %v189, 0
    %377 = vmatprep.subr.bf16.mxu0 0
    %378 = vmatpush1.bf16.msra.mxu0 0
    %379 = vmatprep.subr.bf16.mxu0 0
    %380 = vmatpush1.bf16.msra.mxu0 0
    %381 = vmatprep.subr.bf16.mxu0 0
    %382 = vmatpush1.bf16.msra.mxu0 0
    %383 = vmatprep.subr.bf16.mxu0 0
    %384 = vmatpush1.bf16.msra.mxu0 0
    %385 = vmatprep.subr.bf16.mxu0 0
    %386 = vmatpush1.bf16.msra.mxu0 0
    %387 = vmatprep.subr.bf16.mxu0 0
    %388 = vmatpush1.bf16.msra.mxu0 0
    %389 = vmatprep.subr.bf16.mxu0 0
    %390 = vmatpush1.bf16.msra.mxu0 0
    %391 = vmatprep.subr.bf16.mxu0 0
    %392 = vmatpush1.bf16.msra.mxu0 %v372
    %393 = vmatprep.subr.bf16.mxu0 0
    %394 = vmatpush2.bf16.msra.mxu0 0
    %395 = vmatprep.subr.bf16.mxu0 0
    %396 = vmatpush2.bf16.msra.mxu0 0
    %397 = vmatprep.subr.bf16.mxu0 0
    %398 = vmatpush2.bf16.msra.mxu0 0
    %399 = vmatprep.subr.bf16.mxu0 0
    %400 = vmatpush2.bf16.msra.mxu0 0
    %401 = vmatprep.subr.bf16.mxu0 0
    %402 = vmatpush2.bf16.msra.mxu0 0
    %403 = vmatprep.subr.bf16.mxu0 0
    %404 = vmatpush2.bf16.msra.mxu0 0
    %405 = vmatprep.subr.bf16.mxu0 0
    %406 = vmatpush2.bf16.msra.mxu0 0
    %407 = vmatprep.subr.bf16.mxu0 0
    %408 = vmatpush2.bf16.msra.mxu0 0
    %409 = vmatprep.mubr.bf16.mxu0 0
    %410 = vmatmul.mubr.bf16.gmra.mxu0 %v375
    %v411 = vpop.f32.mrf.mxu0
    %v412 = vadd.f32 %v366, %v411
    %v413 = vpop.f32.mrf.mxu0
    %v414 = vpop.f32.mrf.mxu0
    %v415 = vadd.f32 %v369, %v414
    %v416 = vpop.f32.mrf.mxu0
    %417 = vdwg.mxu0
    %v418 = vpack.c.bf16 %v415, %v412
    %v419 = vunpack.c.l.bf16 %v305
    %v420 = vlaneseq
    %v421 = vshrl.u32 %v420, 7
    %v422 = vsub.s32 0, %v421
    %v423 = vrot.slane %v419, %v422
    %v428 = vunpack.c.l.b16 %v301
    %v429 = vunpack.c.l.b16 %v302
    %v430 = vunpack.c.l.b16 %v303
    %v431 = vunpack.c.l.b16 %v304
    %v432 = vpack.c.b16 %v429, %v428
    %v433 = vpack.c.b16 %v431, %v430
    %vm436 = vcmask 261120
    %v438 = vsel %vm436, %v418, 0
    %440 = vmatprep.subr.bf16.mxu0 0
    %441 = vmatpush1.bf16.msra.mxu0 0
    %442 = vmatprep.subr.bf16.mxu0 0
    %443 = vmatpush1.bf16.msra.mxu0 0
    %444 = vmatprep.subr.bf16.mxu0 0
    %445 = vmatpush1.bf16.msra.mxu0 0
    %446 = vmatprep.subr.bf16.mxu0 0
    %447 = vmatpush1.bf16.msra.mxu0 0
    %448 = vmatprep.subr.bf16.mxu0 0
    %449 = vmatpush1.bf16.msra.mxu0 0
    %450 = vmatprep.subr.bf16.mxu0 0
    %451 = vmatpush1.bf16.msra.mxu0 0
    %452 = vmatprep.subr.bf16.mxu0 0
    %453 = vmatpush1.bf16.msra.mxu0 %v433
    %454 = vmatprep.subr.bf16.mxu0 0
    %455 = vmatpush1.bf16.msra.mxu0 %v432
    %456 = vmatprep.subr.bf16.mxu0 0
    %457 = vmatpush2.bf16.msra.mxu0 0
    %458 = vmatprep.subr.bf16.mxu0 0
    %459 = vmatpush2.bf16.msra.mxu0 0
    %460 = vmatprep.subr.bf16.mxu0 0
    %461 = vmatpush2.bf16.msra.mxu0 0
    %462 = vmatprep.subr.bf16.mxu0 0
    %463 = vmatpush2.bf16.msra.mxu0 0
    %464 = vmatprep.subr.bf16.mxu0 0
    %465 = vmatpush2.bf16.msra.mxu0 0
    %466 = vmatprep.subr.bf16.mxu0 0
    %467 = vmatpush2.bf16.msra.mxu0 0
    %468 = vmatprep.subr.bf16.mxu0 0
    %469 = vmatpush2.bf16.msra.mxu0 0
    %470 = vmatprep.subr.bf16.mxu0 0
    %471 = vmatpush2.bf16.msra.mxu0 0
    %472 = vmatprep.mubr.bf16.mxu0 0
    %473 = vmatmul.mubr.bf16.gmra.mxu0 %v438
    %v474 = vpop.f32.mrf.mxu0
    %v475 = vadd.f32 %v423, %v474
    %v476 = vpop.f32.mrf.mxu0
    %v477 = vpop.f32.mrf.mxu0
    %v478 = vadd.f32 %v423, %v477
    %v479 = vpop.f32.mrf.mxu0
    %480 = vdwg.mxu0
    %v481 = vmax.f32 %v475, 0.0
    %v482 = vmax.f32 %v478, 0.0
    %v483 = vpack.c.bf16 %v482, %v481
    %v484 = vunpack.c.l.bf16 %v314
    %v485 = vlaneseq
    %v486 = vshrl.u32 %v485, 7
    %v487 = vsub.s32 0, %v486
    %v488 = vrot.slane %v484, %v487
    %v497 = vunpack.c.l.b16 %v306
    %v498 = vunpack.c.l.b16 %v307
    %v499 = vunpack.c.l.b16 %v308
    %v500 = vunpack.c.l.b16 %v309
    %v501 = vunpack.c.l.b16 %v310
    %v502 = vunpack.c.l.b16 %v311
    %v503 = vunpack.c.l.b16 %v312
    %v504 = vunpack.c.l.b16 %v313
    %v505 = vpack.c.b16 %v498, %v497
    %v506 = vpack.c.b16 %v500, %v499
    %v507 = vpack.c.b16 %v502, %v501
    %v508 = vpack.c.b16 %v504, %v503
    %vm513 = vcmask 523264
    %v515 = vsel %vm513, %v483, 0
    %517 = vmatprep.subr.bf16.mxu0 0
    %518 = vmatpush1.bf16.msra.mxu0 0
    %519 = vmatprep.subr.bf16.mxu0 0
    %520 = vmatpush1.bf16.msra.mxu0 0
    %521 = vmatprep.subr.bf16.mxu0 0
    %522 = vmatpush1.bf16.msra.mxu0 0
    %523 = vmatprep.subr.bf16.mxu0 0
    %524 = vmatpush1.bf16.msra.mxu0 0
    %525 = vmatprep.subr.bf16.mxu0 0
    %526 = vmatpush1.bf16.msra.mxu0 %v508
    %527 = vmatprep.subr.bf16.mxu0 0
    %528 = vmatpush1.bf16.msra.mxu0 %v507
    %529 = vmatprep.subr.bf16.mxu0 0
    %530 = vmatpush1.bf16.msra.mxu0 %v506
    %531 = vmatprep.subr.bf16.mxu0 0
    %532 = vmatpush1.bf16.msra.mxu0 %v505
    %533 = vmatprep.subr.bf16.mxu0 0
    %534 = vmatpush2.bf16.msra.mxu0 0
    %535 = vmatprep.subr.bf16.mxu0 0
    %536 = vmatpush2.bf16.msra.mxu0 0
    %537 = vmatprep.subr.bf16.mxu0 0
    %538 = vmatpush2.bf16.msra.mxu0 0
    %539 = vmatprep.subr.bf16.mxu0 0
    %540 = vmatpush2.bf16.msra.mxu0 0
    %541 = vmatprep.subr.bf16.mxu0 0
    %542 = vmatpush2.bf16.msra.mxu0 0
    %543 = vmatprep.subr.bf16.mxu0 0
    %544 = vmatpush2.bf16.msra.mxu0 0
    %545 = vmatprep.subr.bf16.mxu0 0
    %546 = vmatpush2.bf16.msra.mxu0 0
    %547 = vmatprep.subr.bf16.mxu0 0
    %548 = vmatpush2.bf16.msra.mxu0 0
    %549 = vmatprep.mubr.bf16.mxu0 0
    %550 = vmatmul.mubr.bf16.gmra.mxu0 %v515
    %v551 = vpop.f32.mrf.mxu0
    %v552 = vadd.f32 %v488, %v551
    %v553 = vpop.f32.mrf.mxu0
    %v554 = vpop.f32.mrf.mxu0
    %v555 = vadd.f32 %v488, %v554
    %v556 = vpop.f32.mrf.mxu0
    %557 = vdwg.mxu0
    %v558 = vsel %vm436, %v552, 0.0
    %v559 = vsel %vm436, %v555, 0.0
    %v560 = vadd.f32 %v558, %v559
    %v561 = vrot.slane %v560, 4
    %v562 = vadd.f32 %v560, %v561
    %v563 = vrot.slane %v562, 2
    %v564 = vadd.f32 %v562, %v563
    %v565 = vrot.slane %v564, 1
    %v566 = vadd.f32 %v564, %v565
    %v567 = vrcp.pop 16.0
    %v568 = vmul.f32 %v566, %v567
    %v569 = vsub.f32 %v552, %v568
    %v570 = vsub.f32 %v555, %v568
    %v571 = vmul.f32 %v569, %v569
    %v572 = vmul.f32 %v570, %v570
    %v573 = vsel %vm436, %v571, 0.0
    %v574 = vsel %vm436, %v572, 0.0
    %v575 = vadd.f32 %v573, %v574
    %v576 = vrot.slane %v575, 4
    %v577 = vadd.f32 %v575, %v576
    %v578 = vrot.slane %v577, 2
    %v579 = vadd.f32 %v577, %v578
    %v580 = vrot.slane %v579, 1
    %v581 = vadd.f32 %v579, %v580
    %v582 = vmul.f32 %v581, %v567
    %v583 = vadd.f32 %v582, 1e-05
    %v584 = vrsqrt.pop %v583
    %v585 = vmul.f32 %v569, %v584
    %v586 = vmul.f32 %v570, %v584
    %v587 = vlaneseq
    %v588 = vshrl.u32 %v587, 7
    %v589 = vsub.s32 1, %v588
    %v590 = vrot.slane %v484, %v589
    %v591 = vmul.f32 %v585, %v590
    %v592 = vmul.f32 %v586, %v590
    %v593 = vlaneseq
    %v594 = vshrl.u32 %v593, 7
    %v595 = vsub.s32 2, %v594
    %v596 = vrot.slane %v484, %v595
    %v597 = vadd.f32 %v591, %v596
    %v598 = vadd.f32 %v592, %v596
    %v599 = vmax.f32 %v597, 0.0
    %v600 = vmax.f32 %v598, 0.0
    %v601 = vld [vmem:[%s1 + $0x18] sm:$0xf]
    %v602 = vld [vmem:[%s1 + $0x1c] sm:$0x1]
    %v603 = vld [vmem:[%s2 + $0x18] sm:$0xf]
    %v604 = vld [vmem:[%s2 + $0x1c] sm:$0xf]
    %v605 = vld [vmem:[%s2 + $0x20] sm:$0xf]
    %v606 = vld [vmem:[%s2 + $0x24] sm:$0xf]
    %v607 = vld [vmem:[%s2 + $0x28] sm:$0x1]
    %v608 = vld [vmem:[%s1 + $0x40] sm:$0xf]
    %v609 = vld [vmem:[%s1 + $0x44] sm:$0xf]
    %v610 = vld [vmem:[%s1 + $0x48] sm:$0xf]
    %v611 = vld [vmem:[%s1 + $0x4c] sm:$0xf]
    %v612 = vld [vmem:[%s1 + $0x50] sm:$0xf]
    %v613 = vld [vmem:[%s1 + $0x54] sm:$0xf]
    %v614 = vld [vmem:[%s1 + $0x58] sm:$0xf]
    %v615 = vld [vmem:[%s1 + $0x5c] sm:$0xf]
    %v616 = vld [vmem:[%s1 + $0x68] sm:$0x3]
    %v619 = vunpack.c.l.b16 %v601
    %v620 = vunpack.c.l.b16 %v602
    %v621 = vpack.c.b16 %v620, %v619
    %v623 = vand.u32 %v621, %v327
    %625 = vmatprep.subr.bf16.mxu0 0
    %626 = vmatpush1.bf16.msra.mxu0 0
    %627 = vmatprep.subr.bf16.mxu0 0
    %628 = vmatpush1.bf16.msra.mxu0 0
    %629 = vmatprep.subr.bf16.mxu0 0
    %630 = vmatpush1.bf16.msra.mxu0 0
    %631 = vmatprep.subr.bf16.mxu0 0
    %632 = vmatpush1.bf16.msra.mxu0 0
    %633 = vmatprep.subr.bf16.mxu0 0
    %634 = vmatpush1.bf16.msra.mxu0 0
    %635 = vmatprep.subr.bf16.mxu0 0
    %636 = vmatpush1.bf16.msra.mxu0 0
    %637 = vmatprep.subr.bf16.mxu0 0
    %638 = vmatpush1.bf16.msra.mxu0 0
    %639 = vmatprep.subr.bf16.mxu0 0
    %640 = vmatpush1.bf16.msra.mxu0 %v623
    %641 = vmatprep.subr.bf16.mxu0 0
    %642 = vmatpush2.bf16.msra.mxu0 0
    %643 = vmatprep.subr.bf16.mxu0 0
    %644 = vmatpush2.bf16.msra.mxu0 0
    %645 = vmatprep.subr.bf16.mxu0 0
    %646 = vmatpush2.bf16.msra.mxu0 0
    %647 = vmatprep.subr.bf16.mxu0 0
    %648 = vmatpush2.bf16.msra.mxu0 0
    %649 = vmatprep.subr.bf16.mxu0 0
    %650 = vmatpush2.bf16.msra.mxu0 0
    %651 = vmatprep.subr.bf16.mxu0 0
    %652 = vmatpush2.bf16.msra.mxu0 0
    %653 = vmatprep.subr.bf16.mxu0 0
    %654 = vmatpush2.bf16.msra.mxu0 0
    %655 = vmatprep.subr.bf16.mxu0 0
    %656 = vmatpush2.bf16.msra.mxu0 0
    %657 = vmatprep.mubr.bf16.mxu0 0
    %658 = vmatmul.mubr.bf16.gmra.mxu0 %v322
    %v659 = vpop.f32.mrf.mxu0
    %v660 = vadd.f32 0.0, %v659
    %v661 = vpop.f32.mrf.mxu0
    %v662 = vpop.f32.mrf.mxu0
    %v663 = vadd.f32 0.0, %v662
    %v664 = vpop.f32.mrf.mxu0
    %665 = vdwg.mxu0
    %v666 = vpack.c.bf16 %v600, %v599
    %667 = vmatprep.subr.bf16.mxu0 0
    %668 = vmatpush1.bf16.msra.mxu0 0
    %669 = vmatprep.subr.bf16.mxu0 0
    %670 = vmatpush1.bf16.msra.mxu0 0
    %671 = vmatprep.subr.bf16.mxu0 0
    %672 = vmatpush1.bf16.msra.mxu0 0
    %673 = vmatprep.subr.bf16.mxu0 0
    %674 = vmatpush1.bf16.msra.mxu0 0
    %675 = vmatprep.subr.bf16.mxu0 0
    %676 = vmatpush1.bf16.msra.mxu0 0
    %677 = vmatprep.subr.bf16.mxu0 0
    %678 = vmatpush1.bf16.msra.mxu0 0
    %679 = vmatprep.subr.bf16.mxu0 0
    %680 = vmatpush1.bf16.msra.mxu0 0
    %681 = vmatprep.subr.bf16.mxu0 0
    %682 = vmatpush1.bf16.msra.mxu0 %v666
    %683 = vmatprep.subr.bf16.mxu0 0
    %684 = vmatpush2.bf16.msra.mxu0 0
    %685 = vmatprep.subr.bf16.mxu0 0
    %686 = vmatpush2.bf16.msra.mxu0 0
    %687 = vmatprep.subr.bf16.mxu0 0
    %688 = vmatpush2.bf16.msra.mxu0 0
    %689 = vmatprep.subr.bf16.mxu0 0
    %690 = vmatpush2.bf16.msra.mxu0 0
    %691 = vmatprep.subr.bf16.mxu0 0
    %692 = vmatpush2.bf16.msra.mxu0 0
    %693 = vmatprep.subr.bf16.mxu0 0
    %694 = vmatpush2.bf16.msra.mxu0 0
    %695 = vmatprep.subr.bf16.mxu0 0
    %696 = vmatpush2.bf16.msra.mxu0 0
    %697 = vmatprep.subr.bf16.mxu0 0
    %698 = vmatpush2.bf16.msra.mxu0 0
    %699 = vmatprep.mubr.bf16.mxu0 0
    %700 = vmatmul.mubr.bf16.gmra.mxu0 %v375
    %v701 = vpop.f32.mrf.mxu0
    %v702 = vadd.f32 %v660, %v701
    %v703 = vpop.f32.mrf.mxu0
    %v704 = vpop.f32.mrf.mxu0
    %v705 = vadd.f32 %v663, %v704
    %v706 = vpop.f32.mrf.mxu0
    %707 = vdwg.mxu0
    %v708 = vpack.c.bf16 %v705, %v702
    %v709 = vunpack.c.l.bf16 %v607
    %v710 = vlaneseq
    %v711 = vshrl.u32 %v710, 7
    %v712 = vsub.s32 0, %v711
    %v713 = vrot.slane %v709, %v712
    %v718 = vunpack.c.l.b16 %v603
    %v719 = vunpack.c.l.b16 %v604
    %v720 = vunpack.c.l.b16 %v605
    %v721 = vunpack.c.l.b16 %v606
    %v722 = vpack.c.b16 %v719, %v718
    %v723 = vpack.c.b16 %v721, %v720
    %v727 = vsel %vm436, %v708, 0
    %729 = vmatprep.subr.bf16.mxu0 0
    %730 = vmatpush1.bf16.msra.mxu0 0
    %731 = vmatprep.subr.bf16.mxu0 0
    %732 = vmatpush1.bf16.msra.mxu0 0
    %733 = vmatprep.subr.bf16.mxu0 0
    %734 = vmatpush1.bf16.msra.mxu0 0
    %735 = vmatprep.subr.bf16.mxu0 0
    %736 = vmatpush1.bf16.msra.mxu0 0
    %737 = vmatprep.subr.bf16.mxu0 0
    %738 = vmatpush1.bf16.msra.mxu0 0
    %739 = vmatprep.subr.bf16.mxu0 0
    %740 = vmatpush1.bf16.msra.mxu0 0
    %741 = vmatprep.subr.bf16.mxu0 0
    %742 = vmatpush1.bf16.msra.mxu0 %v723
    %743 = vmatprep.subr.bf16.mxu0 0
    %744 = vmatpush1.bf16.msra.mxu0 %v722
    %745 = vmatprep.subr.bf16.mxu0 0
    %746 = vmatpush2.bf16.msra.mxu0 0
    %747 = vmatprep.subr.bf16.mxu0 0
    %748 = vmatpush2.bf16.msra.mxu0 0
    %749 = vmatprep.subr.bf16.mxu0 0
    %750 = vmatpush2.bf16.msra.mxu0 0
    %751 = vmatprep.subr.bf16.mxu0 0
    %752 = vmatpush2.bf16.msra.mxu0 0
    %753 = vmatprep.subr.bf16.mxu0 0
    %754 = vmatpush2.bf16.msra.mxu0 0
    %755 = vmatprep.subr.bf16.mxu0 0
    %756 = vmatpush2.bf16.msra.mxu0 0
    %757 = vmatprep.subr.bf16.mxu0 0
    %758 = vmatpush2.bf16.msra.mxu0 0
    %759 = vmatprep.subr.bf16.mxu0 0
    %760 = vmatpush2.bf16.msra.mxu0 0
    %761 = vmatprep.mubr.bf16.mxu0 0
    %762 = vmatmul.mubr.bf16.gmra.mxu0 %v727
    %v763 = vpop.f32.mrf.mxu0
    %v764 = vadd.f32 %v713, %v763
    %v765 = vpop.f32.mrf.mxu0
    %v766 = vpop.f32.mrf.mxu0
    %v767 = vadd.f32 %v713, %v766
    %v768 = vpop.f32.mrf.mxu0
    %769 = vdwg.mxu0
    %v770 = vmax.f32 %v764, 0.0
    %v771 = vmax.f32 %v767, 0.0
    %v772 = vpack.c.bf16 %v771, %v770
    %v773 = vunpack.c.l.bf16 %v616
    %v774 = vlaneseq
    %v775 = vshrl.u32 %v774, 7
    %v776 = vsub.s32 0, %v775
    %v777 = vrot.slane %v773, %v776
    %v786 = vunpack.c.l.b16 %v608
    %v787 = vunpack.c.l.b16 %v609
    %v788 = vunpack.c.l.b16 %v610
    %v789 = vunpack.c.l.b16 %v611
    %v790 = vunpack.c.l.b16 %v612
    %v791 = vunpack.c.l.b16 %v613
    %v792 = vunpack.c.l.b16 %v614
    %v793 = vunpack.c.l.b16 %v615
    %v794 = vpack.c.b16 %v787, %v786
    %v795 = vpack.c.b16 %v789, %v788
    %v796 = vpack.c.b16 %v791, %v790
    %v797 = vpack.c.b16 %v793, %v792
    %v803 = vsel %vm513, %v772, 0
    %805 = vmatprep.subr.bf16.mxu0 0
    %806 = vmatpush1.bf16.msra.mxu0 0
    %807 = vmatprep.subr.bf16.mxu0 0
    %808 = vmatpush1.bf16.msra.mxu0 0
    %809 = vmatprep.subr.bf16.mxu0 0
    %810 = vmatpush1.bf16.msra.mxu0 0
    %811 = vmatprep.subr.bf16.mxu0 0
    %812 = vmatpush1.bf16.msra.mxu0 0
    %813 = vmatprep.subr.bf16.mxu0 0
    %814 = vmatpush1.bf16.msra.mxu0 %v797
    %815 = vmatprep.subr.bf16.mxu0 0
    %816 = vmatpush1.bf16.msra.mxu0 %v796
    %817 = vmatprep.subr.bf16.mxu0 0
    %818 = vmatpush1.bf16.msra.mxu0 %v795
    %819 = vmatprep.subr.bf16.mxu0 0
    %820 = vmatpush1.bf16.msra.mxu0 %v794
    %821 = vmatprep.subr.bf16.mxu0 0
    %822 = vmatpush2.bf16.msra.mxu0 0
    %823 = vmatprep.subr.bf16.mxu0 0
    %824 = vmatpush2.bf16.msra.mxu0 0
    %825 = vmatprep.subr.bf16.mxu0 0
    %826 = vmatpush2.bf16.msra.mxu0 0
    %827 = vmatprep.subr.bf16.mxu0 0
    %828 = vmatpush2.bf16.msra.mxu0 0
    %829 = vmatprep.subr.bf16.mxu0 0
    %830 = vmatpush2.bf16.msra.mxu0 0
    %831 = vmatprep.subr.bf16.mxu0 0
    %832 = vmatpush2.bf16.msra.mxu0 0
    %833 = vmatprep.subr.bf16.mxu0 0
    %834 = vmatpush2.bf16.msra.mxu0 0
    %835 = vmatprep.subr.bf16.mxu0 0
    %836 = vmatpush2.bf16.msra.mxu0 0
    %837 = vmatprep.mubr.bf16.mxu0 0
    %838 = vmatmul.mubr.bf16.gmra.mxu0 %v803
    %v839 = vpop.f32.mrf.mxu0
    %v840 = vadd.f32 %v777, %v839
    %v841 = vpop.f32.mrf.mxu0
    %v842 = vpop.f32.mrf.mxu0
    %v843 = vadd.f32 %v777, %v842
    %v844 = vpop.f32.mrf.mxu0
    %845 = vdwg.mxu0
    %v846 = vsel %vm436, %v840, 0.0
    %v847 = vsel %vm436, %v843, 0.0
    %v848 = vadd.f32 %v846, %v847
    %v849 = vrot.slane %v848, 4
    %v850 = vadd.f32 %v848, %v849
    %v851 = vrot.slane %v850, 2
    %v852 = vadd.f32 %v850, %v851
    %v853 = vrot.slane %v852, 1
    %v854 = vadd.f32 %v852, %v853
    %v855 = vmul.f32 %v854, %v567
    %v856 = vsub.f32 %v840, %v855
    %v857 = vsub.f32 %v843, %v855
    %v858 = vmul.f32 %v856, %v856
    %v859 = vmul.f32 %v857, %v857
    %v860 = vsel %vm436, %v858, 0.0
    %v861 = vsel %vm436, %v859, 0.0
    %v862 = vadd.f32 %v860, %v861
    %v863 = vrot.slane %v862, 4
    %v864 = vadd.f32 %v862, %v863
    %v865 = vrot.slane %v864, 2
    %v866 = vadd.f32 %v864, %v865
    %v867 = vrot.slane %v866, 1
    %v868 = vadd.f32 %v866, %v867
    %v869 = vmul.f32 %v868, %v567
    %v870 = vadd.f32 %v869, 1e-05
    %v871 = vrsqrt.pop %v870
    %v872 = vmul.f32 %v856, %v871
    %v873 = vmul.f32 %v857, %v871
    %v874 = vlaneseq
    %v875 = vshrl.u32 %v874, 7
    %v876 = vsub.s32 1, %v875
    %v877 = vrot.slane %v773, %v876
    %v878 = vmul.f32 %v872, %v877
    %v879 = vmul.f32 %v873, %v877
    %v880 = vlaneseq
    %v881 = vshrl.u32 %v880, 7
    %v882 = vsub.s32 2, %v881
    %v883 = vrot.slane %v773, %v882
    %v884 = vadd.f32 %v878, %v883
    %v885 = vadd.f32 %v879, %v883
    %v886 = vpack.c.bf16 %v885, %v884
    %v888 = vsel %vm373, %v87, 0
    %890 = vmatprep.subr.bf16.mxu0 0
    %891 = vmatpush1.bf16.msra.mxu0 0
    %892 = vmatprep.subr.bf16.mxu0 0
    %893 = vmatpush1.bf16.msra.mxu0 0
    %894 = vmatprep.subr.bf16.mxu0 0
    %895 = vmatpush1.bf16.msra.mxu0 0
    %896 = vmatprep.subr.bf16.mxu0 0
    %897 = vmatpush1.bf16.msra.mxu0 0
    %898 = vmatprep.subr.bf16.mxu0 0
    %899 = vmatpush1.bf16.msra.mxu0 0
    %900 = vmatprep.subr.bf16.mxu0 0
    %901 = vmatpush1.bf16.msra.mxu0 0
    %902 = vmatprep.subr.bf16.mxu0 0
    %903 = vmatpush1.bf16.msra.mxu0 0
    %904 = vmatprep.subr.bf16.mxu0 0
    %905 = vmatpush1.bf16.msra.mxu0 %v886
    %906 = vmatprep.subr.bf16.mxu0 0
    %907 = vmatpush2.bf16.msra.mxu0 0
    %908 = vmatprep.subr.bf16.mxu0 0
    %909 = vmatpush2.bf16.msra.mxu0 0
    %910 = vmatprep.subr.bf16.mxu0 0
    %911 = vmatpush2.bf16.msra.mxu0 0
    %912 = vmatprep.subr.bf16.mxu0 0
    %913 = vmatpush2.bf16.msra.mxu0 0
    %914 = vmatprep.subr.bf16.mxu0 0
    %915 = vmatpush2.bf16.msra.mxu0 0
    %916 = vmatprep.subr.bf16.mxu0 0
    %917 = vmatpush2.bf16.msra.mxu0 0
    %918 = vmatprep.subr.bf16.mxu0 0
    %919 = vmatpush2.bf16.msra.mxu0 0
    %920 = vmatprep.subr.bf16.mxu0 0
    %921 = vmatpush2.bf16.msra.mxu0 0
    %922 = vmatprep.mubr.bf16.mxu0 0
    %923 = vmatmul.mubr.bf16.gmra.mxu0 %v888
    %v924 = vpop.f32.mrf.mxu0
    %v925 = vadd.f32 0.0, %v924
    %v926 = vpop.f32.mrf.mxu0
    %v927 = vpop.f32.mrf.mxu0
    %v928 = vpop.f32.mrf.mxu0
    %929 = vdwg.mxu0
    %v930 = vunpack.c.l.bf16 %v87
    %vm931 = vcmask 123904
    %v932 = vsel %vm931, %v930, 0.0
    %933 = vadd.xlane.f32.xlu0 %v932
    %v934 = vpop.xlane.xlu0 %933
    %v935 = vmax.f32 %v934, 1.0
    %v936 = vrcp.pop %v935
    %v937 = vmul.f32 %v925, %v936
    %v939 = vsel %vm373, %v140, 0
    %941 = vmatprep.subr.bf16.mxu0 0
    %942 = vmatpush1.bf16.msra.mxu0 0
    %943 = vmatprep.subr.bf16.mxu0 0
    %944 = vmatpush1.bf16.msra.mxu0 0
    %945 = vmatprep.subr.bf16.mxu0 0
    %946 = vmatpush1.bf16.msra.mxu0 0
    %947 = vmatprep.subr.bf16.mxu0 0
    %948 = vmatpush1.bf16.msra.mxu0 0
    %949 = vmatprep.subr.bf16.mxu0 0
    %950 = vmatpush1.bf16.msra.mxu0 0
    %951 = vmatprep.subr.bf16.mxu0 0
    %952 = vmatpush1.bf16.msra.mxu0 0
    %953 = vmatprep.subr.bf16.mxu0 0
    %954 = vmatpush1.bf16.msra.mxu0 0
    %955 = vmatprep.subr.bf16.mxu0 0
    %956 = vmatpush1.bf16.msra.mxu0 %v886
    %957 = vmatprep.subr.bf16.mxu0 0
    %958 = vmatpush2.bf16.msra.mxu0 0
    %959 = vmatprep.subr.bf16.mxu0 0
    %960 = vmatpush2.bf16.msra.mxu0 0
    %961 = vmatprep.subr.bf16.mxu0 0
    %962 = vmatpush2.bf16.msra.mxu0 0
    %963 = vmatprep.subr.bf16.mxu0 0
    %964 = vmatpush2.bf16.msra.mxu0 0
    %965 = vmatprep.subr.bf16.mxu0 0
    %966 = vmatpush2.bf16.msra.mxu0 0
    %967 = vmatprep.subr.bf16.mxu0 0
    %968 = vmatpush2.bf16.msra.mxu0 0
    %969 = vmatprep.subr.bf16.mxu0 0
    %970 = vmatpush2.bf16.msra.mxu0 0
    %971 = vmatprep.subr.bf16.mxu0 0
    %972 = vmatpush2.bf16.msra.mxu0 0
    %973 = vmatprep.mubr.bf16.mxu0 0
    %974 = vmatmul.mubr.bf16.gmra.mxu0 %v939
    %v975 = vpop.f32.mrf.mxu0
    %v976 = vadd.f32 0.0, %v975
    %v977 = vpop.f32.mrf.mxu0
    %v978 = vpop.f32.mrf.mxu0
    %v979 = vpop.f32.mrf.mxu0
    %980 = vdwg.mxu0
    %v981 = vld [vmem:[%s1 + $0x80] sm:$0x3]
    %v982 = vpack.c.bf16 %v976, %v976
    %v983 = vld [vmem:[%s1 + $0x70] sm:$0xf]
    %v984 = vld [vmem:[%s1 + $0x74] sm:$0xf]
    %v985 = vld [vmem:[%s1 + $0x78] sm:$0xf]
    %v986 = vld [vmem:[%s1 + $0x7c] sm:$0xf]
    %v987 = vunpack.c.l.bf16 %v981
    %v988 = vlaneseq
    %v989 = vshrl.u32 %v988, 7
    %v990 = vsub.s32 0, %v989
    %v991 = vrot.slane %v987, %v990
    %v996 = vunpack.c.l.b16 %v983
    %v997 = vunpack.c.l.b16 %v984
    %v998 = vunpack.c.l.b16 %v985
    %v999 = vunpack.c.l.b16 %v986
    %v1000 = vpack.c.b16 %v997, %v996
    %v1001 = vpack.c.b16 %v999, %v998
    %v1005 = vsel %vm436, %v982, 0
    %1007 = vmatprep.subr.bf16.mxu0 0
    %1008 = vmatpush1.bf16.msra.mxu0 0
    %1009 = vmatprep.subr.bf16.mxu0 0
    %1010 = vmatpush1.bf16.msra.mxu0 0
    %1011 = vmatprep.subr.bf16.mxu0 0
    %1012 = vmatpush1.bf16.msra.mxu0 0
    %1013 = vmatprep.subr.bf16.mxu0 0
    %1014 = vmatpush1.bf16.msra.mxu0 0
    %1015 = vmatprep.subr.bf16.mxu0 0
    %1016 = vmatpush1.bf16.msra.mxu0 0
    %1017 = vmatprep.subr.bf16.mxu0 0
    %1018 = vmatpush1.bf16.msra.mxu0 0
    %1019 = vmatprep.subr.bf16.mxu0 0
    %1020 = vmatpush1.bf16.msra.mxu0 %v1001
    %1021 = vmatprep.subr.bf16.mxu0 0
    %1022 = vmatpush1.bf16.msra.mxu0 %v1000
    %1023 = vmatprep.subr.bf16.mxu0 0
    %1024 = vmatpush2.bf16.msra.mxu0 0
    %1025 = vmatprep.subr.bf16.mxu0 0
    %1026 = vmatpush2.bf16.msra.mxu0 0
    %1027 = vmatprep.subr.bf16.mxu0 0
    %1028 = vmatpush2.bf16.msra.mxu0 0
    %1029 = vmatprep.subr.bf16.mxu0 0
    %1030 = vmatpush2.bf16.msra.mxu0 0
    %1031 = vmatprep.subr.bf16.mxu0 0
    %1032 = vmatpush2.bf16.msra.mxu0 0
    %1033 = vmatprep.subr.bf16.mxu0 0
    %1034 = vmatpush2.bf16.msra.mxu0 0
    %1035 = vmatprep.subr.bf16.mxu0 0
    %1036 = vmatpush2.bf16.msra.mxu0 0
    %1037 = vmatprep.subr.bf16.mxu0 0
    %1038 = vmatpush2.bf16.msra.mxu0 0
    %1039 = vmatprep.mubr.bf16.mxu0 0
    %1040 = vmatmul.mubr.bf16.gmra.mxu0 %v1005
    %v1041 = vpop.f32.mrf.mxu0
    %v1042 = vadd.f32 %v991, %v1041
    %v1043 = vpop.f32.mrf.mxu0
    %v1044 = vpop.f32.mrf.mxu0
    %v1045 = vpop.f32.mrf.mxu0
    %1046 = vdwg.mxu0
    %v1047 = vmax.f32 %v1042, 0.0
    %vm1048 = vcmask 257024
    %v1049 = vsel %vm1048, %v1047, 0.0
    %1050 = vadd.xlane.f32.xlu0 %v1049
    %v1051 = vpop.xlane.xlu0 %1050
    %v1052 = vrcp.pop 32.0
    %v1053 = vmul.f32 %v1051, %v1052
    %v1054 = vsub.f32 %v1047, %v1053
    %v1055 = vmul.f32 %v1054, %v1054
    %v1056 = vsel %vm1048, %v1055, 0.0
    %1057 = vadd.xlane.f32.xlu0 %v1056
    %v1058 = vpop.xlane.xlu0 %1057
    %v1059 = vmul.f32 %v1058, %v1052
    %v1060 = vadd.f32 %v1059, 1e-05
    %v1061 = vrsqrt.pop %v1060
    %v1062 = vmul.f32 %v1054, %v1061
    %v1063 = vlaneseq
    %v1064 = vshrl.u32 %v1063, 7
    %v1065 = vsub.s32 1, %v1064
    %v1066 = vrot.slane %v987, %v1065
    %v1067 = vmul.f32 %v1062, %v1066
    %v1068 = vlaneseq
    %v1069 = vshrl.u32 %v1068, 7
    %v1070 = vsub.s32 2, %v1069
    %v1071 = vrot.slane %v987, %v1070
    %v1072 = vadd.f32 %v1067, %v1071
    %v1073 = vpack.c.bf16 %v1072, %v1072
    %v1074 = vld [vmem:[%s1 + $0x88] sm:$0xf]
    %v1075 = vld [vmem:[%s1 + $0x8c] sm:$0xf]
    %v1076 = vld [vmem:[%s1 + $0x90] sm:$0xf]
    %v1077 = vld [vmem:[%s1 + $0x94] sm:$0xf]
    %v1078 = vld [vmem:[%s1 + $0x98] sm:$0x1]
    %v1079 = vunpack.c.l.bf16 %v1078
    %v1080 = vlaneseq
    %v1081 = vshrl.u32 %v1080, 7
    %v1082 = vsub.s32 0, %v1081
    %v1083 = vrot.slane %v1079, %v1082
    %v1088 = vunpack.c.l.b16 %v1074
    %v1089 = vunpack.c.l.b16 %v1075
    %v1090 = vunpack.c.l.b16 %v1076
    %v1091 = vunpack.c.l.b16 %v1077
    %v1092 = vpack.c.b16 %v1089, %v1088
    %v1093 = vpack.c.b16 %v1091, %v1090
    %v1097 = vsel %vm436, %v1073, 0
    %1099 = vmatprep.subr.bf16.mxu0 0
    %1100 = vmatpush1.bf16.msra.mxu0 0
    %1101 = vmatprep.subr.bf16.mxu0 0
    %1102 = vmatpush1.bf16.msra.mxu0 0
    %1103 = vmatprep.subr.bf16.mxu0 0
    %1104 = vmatpush1.bf16.msra.mxu0 0
    %1105 = vmatprep.subr.bf16.mxu0 0
    %1106 = vmatpush1.bf16.msra.mxu0 0
    %1107 = vmatprep.subr.bf16.mxu0 0
    %1108 = vmatpush1.bf16.msra.mxu0 0
    %1109 = vmatprep.subr.bf16.mxu0 0
    %1110 = vmatpush1.bf16.msra.mxu0 0
    %1111 = vmatprep.subr.bf16.mxu0 0
    %1112 = vmatpush1.bf16.msra.mxu0 %v1093
    %1113 = vmatprep.subr.bf16.mxu0 0
    %1114 = vmatpush1.bf16.msra.mxu0 %v1092
    %1115 = vmatprep.subr.bf16.mxu0 0
    %1116 = vmatpush2.bf16.msra.mxu0 0
    %1117 = vmatprep.subr.bf16.mxu0 0
    %1118 = vmatpush2.bf16.msra.mxu0 0
    %1119 = vmatprep.subr.bf16.mxu0 0
    %1120 = vmatpush2.bf16.msra.mxu0 0
    %1121 = vmatprep.subr.bf16.mxu0 0
    %1122 = vmatpush2.bf16.msra.mxu0 0
    %1123 = vmatprep.subr.bf16.mxu0 0
    %1124 = vmatpush2.bf16.msra.mxu0 0
    %1125 = vmatprep.subr.bf16.mxu0 0
    %1126 = vmatpush2.bf16.msra.mxu0 0
    %1127 = vmatprep.subr.bf16.mxu0 0
    %1128 = vmatpush2.bf16.msra.mxu0 0
    %1129 = vmatprep.subr.bf16.mxu0 0
    %1130 = vmatpush2.bf16.msra.mxu0 0
    %1131 = vmatprep.mubr.bf16.mxu0 0
    %1132 = vmatmul.mubr.bf16.gmra.mxu0 %v1097
    %v1133 = vpop.f32.mrf.mxu0
    %v1134 = vadd.f32 %v1083, %v1133
    %v1135 = vpop.f32.mrf.mxu0
    %v1136 = vpop.f32.mrf.mxu0
    %v1137 = vpop.f32.mrf.mxu0
    %1138 = vdwg.mxu0
    %vm1139 = vcmask 1041408
    %v1140 = vsel %vm1139, %v937, 0.0
    %v1141 = vsel %vm324, %v1134, 0.0
    %1144 = vrot.lane.b32.xlu0 %v1140, 32
    %v1145 = vpop.permute.xlu0 %1144
    %1146 = vrot.lane.b32.xlu0 0.0, 32
    %v1147 = vpop.permute.xlu0 %1146
    %1151 = vrot.lane.b32.xlu0 %v1141, 64
    %v1152 = vpop.permute.xlu0 %1151
    %1153 = vrot.lane.b32.xlu0 0.0, 64
    %v1154 = vpop.permute.xlu0 %1153
    %v1157 = vsel %vm436, %v884, %v1145
    %v1158 = vsel %vm436, %v885, %v1147
    %v1159 = vsel %vm513, %v1157, %v1152
    %v1160 = vsel %vm513, %v1158, %v1154
    %vm1161 = vcmask 785408
    %v1162 = vsel %vm1161, %v1159, 0.0
    %v1163 = vsel %vm1161, %v1160, 0.0
    %1164 = vst [vmem:[#allocation2] sm:$0xff] %v1162
    %1165 = vst [vmem:[#allocation2 + $0x8] sm:$0xff] %v1163
    // Predicated region
    $region14: #{tpu_custom_call.1} parent=1 // pred_check
      _
    $region15: #{tpu_custom_call.1} parent=1 // pred_check_branch
      %1167 = sbr.rel (0) target = $region17
    $region16: #{tpu_custom_call.1} parent=1 // pred_region
      %s1169 = ssub.s32 256, 256
      %1170 = vsyncadd [#allocation3], %s1169
      %s1171 = sshll.u32 [#allocation2], 4
      %s1172 = int_to_ptr.vmem [resolvable:$true] %s1171
      %1177 = dma.vmem_to_hbm [thread:$0]  %s1172, 256, %s3, [#allocation3], 128, 128, 8
    $region17: #{tpu_custom_call.1} parent=1 // pred_fallthru
      _
    // Predicated region
    $region18: #{tpu_custom_call.1} parent=1 // pred_check
      _
    $region19: #{tpu_custom_call.1} parent=1 // pred_check_branch
      %1179 = sbr.rel (0) target = $region21
    $region20: #{tpu_custom_call.1} parent=1 // pred_region
      %1180 = dma.done [#allocation3], 256
    $region21: #{tpu_custom_call.1} parent=1 // pred_fallthru
      _
    %1181 = vsyncpa [#allocation3], 1

</llo_original>
